<compile_context>
chip_gen: v7x
topology: tpu7x:2x2x1
jax: 0.10.0
libtpu: 0.0.40
codegen_flags: <defaults>
</compile_context>

<pallas_src>
import jax
import jax.numpy as jnp
from jax.experimental import pallas as pl
from jax.experimental.pallas import tpu as pltpu


def _autoencoder_kernel(x_ref, w1_ref, b1_ref, w2_ref, b2_ref, o_ref):
    # Encoder: Linear (bf16 MXU matmul, f32 accumulation) + bias + ReLU in f32.
    h = jnp.dot(x_ref[...], w1_ref[...], preferred_element_type=jnp.float32)
    h = jnp.maximum(h + b1_ref[...], 0.0)
    # Decoder: Linear (bf16 MXU matmul, f32 accumulation) + bias + Sigmoid in f32.
    y = jnp.dot(h.astype(jnp.bfloat16), w2_ref[...],
                preferred_element_type=jnp.float32)
    y = y + b2_ref[...]
    o_ref[...] = jax.nn.sigmoid(y).astype(o_ref.dtype)


def autoencoder_forward(x_nchw, w1, b1, w2, b2, *, batch_tile=256):
    """x_nchw: (B, C, H, W) float32. Returns (B, OUT) float32.

    Weights/inputs are streamed as bf16; accumulation and the elementwise
    epilogue run in f32 inside the kernel.
    """
    B = x_nchw.shape[0]
    d_in = x_nchw.shape[1] * x_nchw.shape[2] * x_nchw.shape[3]
    hid = w1.shape[1]
    out = w2.shape[1]

    # Flatten in the same element order as torch's x.flatten(1) on NCHW.
    x_flat = x_nchw.reshape(B, d_in).astype(jnp.bfloat16)
    w1_bf = w1.astype(jnp.bfloat16)
    w2_bf = w2.astype(jnp.bfloat16)
    b1_2d = b1.reshape(1, hid).astype(jnp.float32)
    b2_2d = b2.reshape(1, out).astype(jnp.float32)

    # Choose a batch tile: a large multiple of 8 (>=256 when the batch allows)
    # so the MXU sees full tiles and per-step pipeline overhead is amortized.
    if B >= batch_tile:
        tb = batch_tile
    else:
        tb = max(8, -(-B // 8) * 8)        # round small batches up to a sublane multiple
    b_pad = pl.cdiv(B, tb) * tb
    if b_pad != B:
        x_flat = jnp.pad(x_flat, ((0, b_pad - B), (0, 0)))

    grid = (b_pad // tb,)

    # Weights (~1.5 MiB bf16) use a constant index_map -> fetched once, kept
    # VMEM-resident across all batch tiles of this call. x/out tiles pipeline
    # against compute. Working set is far under VMEM limits on v5e/v6e/v7x.
    # TODO(synk): across repeated fit/evaluate calls the weights are still
    # re-DMA'd per call; a cross-call weight-prefetch (P10) could remove that.
    y_pad = pl.pallas_call(
        _autoencoder_kernel,
        out_shape=jax.ShapeDtypeStruct((b_pad, out), jnp.float32),
        grid=grid,
        in_specs=[
            pl.BlockSpec((tb, d_in), lambda i: (i, 0)),    # x tile follows grid
            pl.BlockSpec((d_in, hid), lambda i: (0, 0)),   # W1 resident
            pl.BlockSpec((1, hid), lambda i: (0, 0)),      # b1 resident
            pl.BlockSpec((hid, out), lambda i: (0, 0)),    # W2 resident
            pl.BlockSpec((1, out), lambda i: (0, 0)),      # b2 resident
        ],
        out_specs=pl.BlockSpec((tb, out), lambda i: (i, 0)),
        compiler_params=pltpu.CompilerParams(
            dimension_semantics=("parallel",),             # shards tiles across v7x's 2 TCs
        ),
    )(x_flat, w1_bf, b1_2d, w2_bf, b2_2d)

    return y_pad[:B] if b_pad != B else y_pad


def _reference(x_nchw, w1, b1, w2, b2):
    """Pure-JAX reference mirroring the kernel's bf16-input / f32-accumulate path."""
    B = x_nchw.shape[0]
    x_bf = x_nchw.reshape(B, -1).astype(jnp.bfloat16)
    h = jnp.dot(x_bf, w1.astype(jnp.bfloat16),
                preferred_element_type=jnp.float32) + b1.reshape(1, -1)
    h = jnp.maximum(h, 0.0)
    y = jnp.dot(h.astype(jnp.bfloat16), w2.astype(jnp.bfloat16),
                preferred_element_type=jnp.float32) + b2.reshape(1, -1)
    return jax.nn.sigmoid(y)


if __name__ == "__main__":
    # Shapes implied by the module's fit/evaluate: (B, 2, 32, 32) -> (B, 1024)
    B, C, H, W = 2, 2, 32, 32
    D_IN = C * H * W            # 2048
    HID = 256
    OUT = H * W                 # 1024

    key = jax.random.PRNGKey(0)
    kx, k1, k2, k3, k4, kx2 = jax.random.split(key, 6)

    x = jax.random.normal(kx, (B, C, H, W), dtype=jnp.float32)
    # Deterministic, PyTorch-Linear-like init scale
    w1 = jax.random.uniform(k1, (D_IN, HID), jnp.float32, -1.0, 1.0) / jnp.sqrt(D_IN)
    b1 = jax.random.uniform(k2, (HID,), jnp.float32, -1.0, 1.0) / jnp.sqrt(D_IN)
    w2 = jax.random.uniform(k3, (HID, OUT), jnp.float32, -1.0, 1.0) / jnp.sqrt(HID)
    b2 = jax.random.uniform(k4, (OUT,), jnp.float32, -1.0, 1.0) / jnp.sqrt(HID)

    # Small batch (module-implied shape): single padded tile.
    y = autoencoder_forward(x, w1, b1, w2, b2)
    y = jax.block_until_ready(y)
    y_ref = _reference(x, w1, b1, w2, b2)
    assert y.shape == (B, OUT), y.shape
    assert jnp.allclose(y, y_ref, atol=5e-3, rtol=5e-3), "mismatch vs reference (small batch)"

    # Larger batch: exercises the multi-tile 'parallel' grid with resident weights.
    B2 = 512
    x2 = jax.random.normal(kx2, (B2, C, H, W), dtype=jnp.float32)
    y2 = autoencoder_forward(x2, w1, b1, w2, b2)
    y2 = jax.block_until_ready(y2)
    y2_ref = _reference(x2, w1, b1, w2, b2)
    assert y2.shape == (B2, OUT), y2.shape
    assert jnp.allclose(y2, y2_ref, atol=5e-3, rtol=5e-3), "mismatch vs reference (large batch)"

    print("KERNEL_OK")
</pallas_src>

<mosaic_0001>
module attributes {stable_mosaic.version = 11 : i64} {
  func.func @_autoencoder_kernel(%arg0: i32, %arg1: memref<8x2048xbf16, #tpu.memory_space<vmem>>, %arg2: memref<2048x256xbf16, #tpu.memory_space<vmem>>, %arg3: memref<1x256xf32, #tpu.memory_space<vmem>>, %arg4: memref<256x1024xbf16, #tpu.memory_space<vmem>>, %arg5: memref<1x1024xf32, #tpu.memory_space<vmem>>, %arg6: memref<8x1024xf32, #tpu.memory_space<vmem>>) attributes {dimension_semantics = [#tpu.dimension_semantics<parallel>], iteration_bounds = array<i64: 1>, scalar_prefetch = 0 : i64, scratch_operands = 0 : i64, tpu.core_type = #tpu.core_type<tc>, window_params = [{transform_indices = @transform_0, window_bounds = array<i64: 8, 2048>}, {pipeline_mode = #tpu.pipeline_mode<synchronous>, transform_indices = @transform_1, window_bounds = array<i64: 2048, 256>}, {pipeline_mode = #tpu.pipeline_mode<synchronous>, transform_indices = @transform_2, window_bounds = array<i64: 1, 256>}, {pipeline_mode = #tpu.pipeline_mode<synchronous>, transform_indices = @transform_3, window_bounds = array<i64: 256, 1024>}, {pipeline_mode = #tpu.pipeline_mode<synchronous>, transform_indices = @transform_4, window_bounds = array<i64: 1, 1024>}, {transform_indices = @transform_5, window_bounds = array<i64: 8, 1024>}]} {
    %c0 = arith.constant 0 : index
    %c0_0 = arith.constant 0 : index
    %0 = vector.load %arg1[%c0, %c0_0] : memref<8x2048xbf16, #tpu.memory_space<vmem>>, vector<8x2048xbf16>
    %c0_1 = arith.constant 0 : index
    %c0_2 = arith.constant 0 : index
    %1 = vector.load %arg2[%c0_1, %c0_2] : memref<2048x256xbf16, #tpu.memory_space<vmem>>, vector<2048x256xbf16>
    %cst = arith.constant dense<0.000000e+00> : vector<8x256xf32>
    %2 = tpu.matmul %0, %1, %cst {dimension_numbers = #tpu.dot_dimension_numbers<[1], [0], [0], [1], [0, 0, 1, 1], [], []>} : vector<8x2048xbf16>, vector<2048x256xbf16>, vector<8x256xf32> -> vector<8x256xf32>
    %c0_3 = arith.constant 0 : index
    %c0_4 = arith.constant 0 : index
    %3 = vector.load %arg3[%c0_3, %c0_4] : memref<1x256xf32, #tpu.memory_space<vmem>>, vector<1x256xf32>
    %4 = vector.broadcast %3 : vector<1x256xf32> to vector<8x256xf32>
    %5 = arith.addf %2, %4 : vector<8x256xf32>
    %cst_5 = arith.constant 0.000000e+00 : f32
    %6 = vector.broadcast %cst_5 : f32 to vector<8x256xf32>
    %7 = arith.maximumf %5, %6 : vector<8x256xf32>
    %8 = arith.truncf %7 : vector<8x256xf32> to vector<8x256xbf16>
    %c0_6 = arith.constant 0 : index
    %c0_7 = arith.constant 0 : index
    %9 = vector.load %arg4[%c0_6, %c0_7] : memref<256x1024xbf16, #tpu.memory_space<vmem>>, vector<256x1024xbf16>
    %cst_8 = arith.constant dense<0.000000e+00> : vector<8x1024xf32>
    %10 = tpu.matmul %8, %9, %cst_8 {dimension_numbers = #tpu.dot_dimension_numbers<[1], [0], [0], [1], [0, 0, 1, 1], [], []>} : vector<8x256xbf16>, vector<256x1024xbf16>, vector<8x1024xf32> -> vector<8x1024xf32>
    %c0_9 = arith.constant 0 : index
    %c0_10 = arith.constant 0 : index
    %11 = vector.load %arg5[%c0_9, %c0_10] : memref<1x1024xf32, #tpu.memory_space<vmem>>, vector<1x1024xf32>
    %12 = vector.broadcast %11 : vector<1x1024xf32> to vector<8x1024xf32>
    %13 = arith.addf %10, %12 : vector<8x1024xf32>
    %14 = arith.negf %13 : vector<8x1024xf32>
    %15 = math.exp %14 : vector<8x1024xf32>
    %cst_11 = arith.constant 1.000000e+00 : f32
    %16 = vector.broadcast %cst_11 : f32 to vector<8x1024xf32>
    %17 = arith.addf %16, %15 : vector<8x1024xf32>
    %18 = arith.divf %16, %17 : vector<8x1024xf32>
    %c0_12 = arith.constant 0 : index
    %c0_13 = arith.constant 0 : index
    %19 = vector.load %arg6[%c0_12, %c0_13] : memref<8x1024xf32, #tpu.memory_space<vmem>>, vector<8x1024xf32>
    tpu.vector_store %arg6[%c0_12, %c0_13], %18 {strides = array<i32>} : memref<8x1024xf32, #tpu.memory_space<vmem>>, vector<8x1024xf32>,
    return
  }
  func.func @transform_0(%arg0: i32) -> (i32, i32) {
    %c0_i32 = arith.constant 0 : i32
    %c0_i32_0 = arith.constant 0 : i32
    return %arg0, %c0_i32 : i32, i32
  }
  func.func @transform_1(%arg0: i32) -> (i32, i32) {
    %c0_i32 = arith.constant 0 : i32
    %c0_i32_0 = arith.constant 0 : i32
    %c0_i32_1 = arith.constant 0 : i32
    return %c0_i32, %c0_i32_0 : i32, i32
  }
  func.func @transform_2(%arg0: i32) -> (i32, i32) {
    %c0_i32 = arith.constant 0 : i32
    %c0_i32_0 = arith.constant 0 : i32
    %c0_i32_1 = arith.constant 0 : i32
    return %c0_i32, %c0_i32_0 : i32, i32
  }
  func.func @transform_3(%arg0: i32) -> (i32, i32) {
    %c0_i32 = arith.constant 0 : i32
    %c0_i32_0 = arith.constant 0 : i32
    %c0_i32_1 = arith.constant 0 : i32
    return %c0_i32, %c0_i32_0 : i32, i32
  }
  func.func @transform_4(%arg0: i32) -> (i32, i32) {
    %c0_i32 = arith.constant 0 : i32
    %c0_i32_0 = arith.constant 0 : i32
    %c0_i32_1 = arith.constant 0 : i32
    return %c0_i32, %c0_i32_0 : i32, i32
  }
  func.func @transform_5(%arg0: i32) -> (i32, i32) {
    %c0_i32 = arith.constant 0 : i32
    %c0_i32_0 = arith.constant 0 : i32
    return %arg0, %c0_i32 : i32, i32
  }
}

</mosaic_0001>

<llo_original>
// kernel: tpu_custom_call.1
$region0: #{tpu_custom_call.1}
  #allocation0 [shape = 'u32[]', space=smem, size = 0x4, offset = 0x4, fixed_abs, tag = 'smem constant byte address 0x4 - core index']
  #allocation1 [shape = 'u32[144,128]{1,0:T(1,128)}', space=vmem, size = 0x12000, scoped, tag = 'internal scratch']
  %s0 = inlined_call_operand.hbm [shape: bf16[8,2048], index: 0, kind: input, shape index: {}]
  %s1 = inlined_call_operand.hbm [shape: bf16[2048,256], index: 1, kind: input, shape index: {}]
  %s2 = inlined_call_operand.vmem [shape: f32[1,256], index: 2, kind: input, shape index: {}]
  %s3 = inlined_call_operand.hbm [shape: bf16[256,1024], index: 3, kind: input, shape index: {}]
  %s4 = inlined_call_operand.vmem [shape: f32[1,1024], index: 4, kind: input, shape index: {}]
  %s5 = inlined_call_operand.hbm [shape: f32[8,1024], index: 5, kind: output, shape index: {}]
  %s6 = sld [smem:[#allocation0]]
  $region42: #{tpu_custom_call.1} parent=0
    _
  %s8 = ssub.s32 1, %s6
  %s9 = scalar_select 0, %s8, %s6
  $region1: #{tpu_custom_call.1} parent=0
    #allocation2 [shape = 'u8[32768]{0}', space=vmem, size = 0x8000, scoped, tag = 'input window, operand 0, single buffered']
    #allocation3 [shape = 's32[1]{0}', space=sflag, size = 0x4, scoped, tag = 'scoped memory for tpu_custom_call.1']
    #allocation4 [shape = 's32[1]{0}', space=sflag, size = 0x4, scoped, tag = 'scoped memory for tpu_custom_call.1']
    #allocation5 [shape = 'u8[1048576]{0}', space=vmem, size = 0x100000, scoped, tag = 'input window, operand 1, single buffered']
    #allocation6 [shape = 's32[1]{0}', space=sflag, size = 0x4, scoped, tag = 'scoped memory for tpu_custom_call.1']
    #allocation7 [shape = 'u8[524288]{0}', space=vmem, size = 0x80000, scoped, tag = 'input window, operand 3, single buffered']
    #allocation8 [shape = 'u8[32768]{0}', space=vmem, size = 0x8000, scoped, tag = 'output window, operand 0, single buffered']
    %10 = vsyncpa [#allocation3], 0
    %11 = vsyncpa [#allocation6], 0
    %12 = vsyncpa [#allocation4], 0
    // Predicated region
    $region2: #{tpu_custom_call.1} parent=1 // pred_check
      _
    $region3: #{tpu_custom_call.1} parent=1 // pred_check_branch
      %14 = sbr.rel (0) target = $region5
    $region4: #{tpu_custom_call.1} parent=1 // pred_region
      %s16 = ssub.s32 1024, 1024
      %17 = vsyncadd [#allocation3], %s16
      %s19 = sshll.u32 [#allocation2], 4
      %s20 = int_to_ptr.vmem [resolvable:$true] %s19
      %22 = dma.hbm_to_vmem [thread:$0]  %s0, 1024, %s20, [#allocation3]
    $region5: #{tpu_custom_call.1} parent=1 // pred_fallthru
      _
    // Predicated region
    $region6: #{tpu_custom_call.1} parent=1 // pred_check
      _
    $region7: #{tpu_custom_call.1} parent=1 // pred_check_branch
      %24 = sbr.rel (0) target = $region9
    $region8: #{tpu_custom_call.1} parent=1 // pred_region
      %s26 = ssub.s32 32768, 32768
      %27 = vsyncadd [#allocation6], %s26
      %s28 = sshll.u32 [#allocation5], 4
      %s29 = int_to_ptr.vmem [resolvable:$true] %s28
      %34 = dma.hbm_to_vmem [thread:$0]  %s1, 32768, %s29, [#allocation6], 128, 128, 8
    $region9: #{tpu_custom_call.1} parent=1 // pred_fallthru
      _
    // Predicated region
    $region10: #{tpu_custom_call.1} parent=1 // pred_check
      _
    $region11: #{tpu_custom_call.1} parent=1 // pred_check_branch
      %36 = sbr.rel (0) target = $region13
    $region12: #{tpu_custom_call.1} parent=1 // pred_region
      _
    $region13: #{tpu_custom_call.1} parent=1 // pred_fallthru
      _
    // Predicated region
    $region14: #{tpu_custom_call.1} parent=1 // pred_check
      _
    $region15: #{tpu_custom_call.1} parent=1 // pred_check_branch
      %38 = sbr.rel (0) target = $region17
    $region16: #{tpu_custom_call.1} parent=1 // pred_region
      %s40 = ssub.s32 16384, 16384
      %41 = vsyncadd [#allocation6], %s40
      %s42 = sshll.u32 [#allocation7], 4
      %s43 = int_to_ptr.vmem [resolvable:$true] %s42
      %48 = dma.hbm_to_vmem [thread:$0]  %s3, 16384, %s43, [#allocation6], 512, 512, 32
    $region17: #{tpu_custom_call.1} parent=1 // pred_fallthru
      _
    // Predicated region
    $region18: #{tpu_custom_call.1} parent=1 // pred_check
      _
    $region19: #{tpu_custom_call.1} parent=1 // pred_check_branch
      %50 = sbr.rel (0) target = $region21
    $region20: #{tpu_custom_call.1} parent=1 // pred_region
      _
    $region21: #{tpu_custom_call.1} parent=1 // pred_fallthru
      _
    // Predicated region
    $region22: #{tpu_custom_call.1} parent=1 // pred_check
      _
    $region23: #{tpu_custom_call.1} parent=1 // pred_check_branch
      %52 = sbr.rel (0) target = $region25
    $region24: #{tpu_custom_call.1} parent=1 // pred_region
      %53 = dma.done [#allocation3], 1024
    $region25: #{tpu_custom_call.1} parent=1 // pred_fallthru
      _
    // Predicated region
    $region26: #{tpu_custom_call.1} parent=1 // pred_check
      _
    $region27: #{tpu_custom_call.1} parent=1 // pred_check_branch
      %55 = sbr.rel (0) target = $region29
    $region28: #{tpu_custom_call.1} parent=1 // pred_region
      %56 = dma.done [#allocation6], 32768
    $region29: #{tpu_custom_call.1} parent=1 // pred_fallthru
      _
    // Predicated region
    $region30: #{tpu_custom_call.1} parent=1 // pred_check
      _
    $region31: #{tpu_custom_call.1} parent=1 // pred_check_branch
      %58 = sbr.rel (0) target = $region33
    $region32: #{tpu_custom_call.1} parent=1 // pred_region
      %59 = dma.done [#allocation6], 16384
    $region33: #{tpu_custom_call.1} parent=1 // pred_fallthru
      _
    %v60 = vld [vmem:[#allocation2] sm:$0xff]
    %v61 = vld [vmem:[#allocation2 + $0x8] sm:$0xff]
    %v62 = vld [vmem:[#allocation2 + $0x10] sm:$0xff]
    %v63 = vld [vmem:[#allocation2 + $0x18] sm:$0xff]
    %v64 = vld [vmem:[#allocation2 + $0x20] sm:$0xff]
    %v65 = vld [vmem:[#allocation2 + $0x28] sm:$0xff]
    %v66 = vld [vmem:[#allocation2 + $0x30] sm:$0xff]
    %v67 = vld [vmem:[#allocation2 + $0x38] sm:$0xff]
    %v68 = vld [vmem:[#allocation5] sm:$0xff]
    %v69 = vld [vmem:[#allocation5 + $0x8] sm:$0xff]
    %v70 = vld [vmem:[#allocation5 + $0x10] sm:$0xff]
    %v71 = vld [vmem:[#allocation5 + $0x18] sm:$0xff]
    %v72 = vld [vmem:[#allocation5 + $0x20] sm:$0xff]
    %v73 = vld [vmem:[#allocation5 + $0x28] sm:$0xff]
    %v74 = vld [vmem:[#allocation5 + $0x30] sm:$0xff]
    %v75 = vld [vmem:[#allocation5 + $0x38] sm:$0xff]
    %v76 = vld [vmem:[#allocation5 + $0x40] sm:$0xff]
    %v77 = vld [vmem:[#allocation5 + $0x48] sm:$0xff]
    %v78 = vld [vmem:[#allocation5 + $0x50] sm:$0xff]
    %v79 = vld [vmem:[#allocation5 + $0x58] sm:$0xff]
    %v80 = vld [vmem:[#allocation5 + $0x60] sm:$0xff]
    %v81 = vld [vmem:[#allocation5 + $0x68] sm:$0xff]
    %v82 = vld [vmem:[#allocation5 + $0x70] sm:$0xff]
    %v83 = vld [vmem:[#allocation5 + $0x78] sm:$0xff]
    %v84 = vld [vmem:[#allocation5 + $0x80] sm:$0xff]
    %v85 = vld [vmem:[#allocation5 + $0x88] sm:$0xff]
    %v86 = vld [vmem:[#allocation5 + $0x90] sm:$0xff]
    %v87 = vld [vmem:[#allocation5 + $0x98] sm:$0xff]
    %v88 = vld [vmem:[#allocation5 + $0xa0] sm:$0xff]
    %v89 = vld [vmem:[#allocation5 + $0xa8] sm:$0xff]
    %v90 = vld [vmem:[#allocation5 + $0xb0] sm:$0xff]
    %v91 = vld [vmem:[#allocation5 + $0xb8] sm:$0xff]
    %v92 = vld [vmem:[#allocation5 + $0xc0] sm:$0xff]
    %v93 = vld [vmem:[#allocation5 + $0xc8] sm:$0xff]
    %v94 = vld [vmem:[#allocation5 + $0xd0] sm:$0xff]
    %v95 = vld [vmem:[#allocation5 + $0xd8] sm:$0xff]
    %v96 = vld [vmem:[#allocation5 + $0xe0] sm:$0xff]
    %v97 = vld [vmem:[#allocation5 + $0xe8] sm:$0xff]
    %v98 = vld [vmem:[#allocation5 + $0xf0] sm:$0xff]
    %v99 = vld [vmem:[#allocation5 + $0xf8] sm:$0xff]
    %v100 = vld [vmem:[#allocation5 + $0x100] sm:$0xff]
    %v101 = vld [vmem:[#allocation5 + $0x108] sm:$0xff]
    %v102 = vld [vmem:[#allocation5 + $0x110] sm:$0xff]
    %v103 = vld [vmem:[#allocation5 + $0x118] sm:$0xff]
    %v104 = vld [vmem:[#allocation5 + $0x120] sm:$0xff]
    %v105 = vld [vmem:[#allocation5 + $0x128] sm:$0xff]
    %v106 = vld [vmem:[#allocation5 + $0x130] sm:$0xff]
    %v107 = vld [vmem:[#allocation5 + $0x138] sm:$0xff]
    %v108 = vld [vmem:[#allocation5 + $0x140] sm:$0xff]
    %v109 = vld [vmem:[#allocation5 + $0x148] sm:$0xff]
    %v110 = vld [vmem:[#allocation5 + $0x150] sm:$0xff]
    %v111 = vld [vmem:[#allocation5 + $0x158] sm:$0xff]
    %v112 = vld [vmem:[#allocation5 + $0x160] sm:$0xff]
    %v113 = vld [vmem:[#allocation5 + $0x168] sm:$0xff]
    %v114 = vld [vmem:[#allocation5 + $0x170] sm:$0xff]
    %v115 = vld [vmem:[#allocation5 + $0x178] sm:$0xff]
    %v116 = vld [vmem:[#allocation5 + $0x180] sm:$0xff]
    %v117 = vld [vmem:[#allocation5 + $0x188] sm:$0xff]
    %v118 = vld [vmem:[#allocation5 + $0x190] sm:$0xff]
    %v119 = vld [vmem:[#allocation5 + $0x198] sm:$0xff]
    %v120 = vld [vmem:[#allocation5 + $0x1a0] sm:$0xff]
    %v121 = vld [vmem:[#allocation5 + $0x1a8] sm:$0xff]
    %v122 = vld [vmem:[#allocation5 + $0x1b0] sm:$0xff]
    %v123 = vld [vmem:[#allocation5 + $0x1b8] sm:$0xff]
    %v124 = vld [vmem:[#allocation5 + $0x1c0] sm:$0xff]
    %v125 = vld [vmem:[#allocation5 + $0x1c8] sm:$0xff]
    %v126 = vld [vmem:[#allocation5 + $0x1d0] sm:$0xff]
    %v127 = vld [vmem:[#allocation5 + $0x1d8] sm:$0xff]
    %v128 = vld [vmem:[#allocation5 + $0x1e0] sm:$0xff]
    %v129 = vld [vmem:[#allocation5 + $0x1e8] sm:$0xff]
    %v130 = vld [vmem:[#allocation5 + $0x1f0] sm:$0xff]
    %v131 = vld [vmem:[#allocation5 + $0x1f8] sm:$0xff]
    %v132 = vld [vmem:[#allocation5 + $0x200] sm:$0xff]
    %v133 = vld [vmem:[#allocation5 + $0x208] sm:$0xff]
    %v134 = vld [vmem:[#allocation5 + $0x210] sm:$0xff]
    %v135 = vld [vmem:[#allocation5 + $0x218] sm:$0xff]
    %v136 = vld [vmem:[#allocation5 + $0x220] sm:$0xff]
    %v137 = vld [vmem:[#allocation5 + $0x228] sm:$0xff]
    %v138 = vld [vmem:[#allocation5 + $0x230] sm:$0xff]
    %v139 = vld [vmem:[#allocation5 + $0x238] sm:$0xff]
    %v140 = vld [vmem:[#allocation5 + $0x240] sm:$0xff]
    %v141 = vld [vmem:[#allocation5 + $0x248] sm:$0xff]
    %v142 = vld [vmem:[#allocation5 + $0x250] sm:$0xff]
    %v143 = vld [vmem:[#allocation5 + $0x258] sm:$0xff]
    %v144 = vld [vmem:[#allocation5 + $0x260] sm:$0xff]
    %v145 = vld [vmem:[#allocation5 + $0x268] sm:$0xff]
    %v146 = vld [vmem:[#allocation5 + $0x270] sm:$0xff]
    %v147 = vld [vmem:[#allocation5 + $0x278] sm:$0xff]
    %v148 = vld [vmem:[#allocation5 + $0x280] sm:$0xff]
    %v149 = vld [vmem:[#allocation5 + $0x288] sm:$0xff]
    %v150 = vld [vmem:[#allocation5 + $0x290] sm:$0xff]
    %v151 = vld [vmem:[#allocation5 + $0x298] sm:$0xff]
    %v152 = vld [vmem:[#allocation5 + $0x2a0] sm:$0xff]
    %v153 = vld [vmem:[#allocation5 + $0x2a8] sm:$0xff]
    %v154 = vld [vmem:[#allocation5 + $0x2b0] sm:$0xff]
    %v155 = vld [vmem:[#allocation5 + $0x2b8] sm:$0xff]
    %v156 = vld [vmem:[#allocation5 + $0x2c0] sm:$0xff]
    %v157 = vld [vmem:[#allocation5 + $0x2c8] sm:$0xff]
    %v158 = vld [vmem:[#allocation5 + $0x2d0] sm:$0xff]
    %v159 = vld [vmem:[#allocation5 + $0x2d8] sm:$0xff]
    %v160 = vld [vmem:[#allocation5 + $0x2e0] sm:$0xff]
    %v161 = vld [vmem:[#allocation5 + $0x2e8] sm:$0xff]
    %v162 = vld [vmem:[#allocation5 + $0x2f0] sm:$0xff]
    %v163 = vld [vmem:[#allocation5 + $0x2f8] sm:$0xff]
    %v164 = vld [vmem:[#allocation5 + $0x300] sm:$0xff]
    %v165 = vld [vmem:[#allocation5 + $0x308] sm:$0xff]
    %v166 = vld [vmem:[#allocation5 + $0x310] sm:$0xff]
    %v167 = vld [vmem:[#allocation5 + $0x318] sm:$0xff]
    %v168 = vld [vmem:[#allocation5 + $0x320] sm:$0xff]
    %v169 = vld [vmem:[#allocation5 + $0x328] sm:$0xff]
    %v170 = vld [vmem:[#allocation5 + $0x330] sm:$0xff]
    %v171 = vld [vmem:[#allocation5 + $0x338] sm:$0xff]
    %v172 = vld [vmem:[#allocation5 + $0x340] sm:$0xff]
    %v173 = vld [vmem:[#allocation5 + $0x348] sm:$0xff]
    %v174 = vld [vmem:[#allocation5 + $0x350] sm:$0xff]
    %v175 = vld [vmem:[#allocation5 + $0x358] sm:$0xff]
    %v176 = vld [vmem:[#allocation5 + $0x360] sm:$0xff]
    %v177 = vld [vmem:[#allocation5 + $0x368] sm:$0xff]
    %v178 = vld [vmem:[#allocation5 + $0x370] sm:$0xff]
    %v179 = vld [vmem:[#allocation5 + $0x378] sm:$0xff]
    %v180 = vld [vmem:[#allocation5 + $0x380] sm:$0xff]
    %v181 = vld [vmem:[#allocation5 + $0x388] sm:$0xff]
    %v182 = vld [vmem:[#allocation5 + $0x390] sm:$0xff]
    %v183 = vld [vmem:[#allocation5 + $0x398] sm:$0xff]
    %v184 = vld [vmem:[#allocation5 + $0x3a0] sm:$0xff]
    %v185 = vld [vmem:[#allocation5 + $0x3a8] sm:$0xff]
    %v186 = vld [vmem:[#allocation5 + $0x3b0] sm:$0xff]
    %v187 = vld [vmem:[#allocation5 + $0x3b8] sm:$0xff]
    %v188 = vld [vmem:[#allocation5 + $0x3c0] sm:$0xff]
    %v189 = vld [vmem:[#allocation5 + $0x3c8] sm:$0xff]
    %v190 = vld [vmem:[#allocation5 + $0x3d0] sm:$0xff]
    %v191 = vld [vmem:[#allocation5 + $0x3d8] sm:$0xff]
    %v192 = vld [vmem:[#allocation5 + $0x3e0] sm:$0xff]
    %v193 = vld [vmem:[#allocation5 + $0x3e8] sm:$0xff]
    %v194 = vld [vmem:[#allocation5 + $0x3f0] sm:$0xff]
    %v195 = vld [vmem:[#allocation5 + $0x3f8] sm:$0xff]
    %v196 = vld [vmem:[#allocation5 + $0x400] sm:$0xff]
    %v197 = vld [vmem:[#allocation5 + $0x408] sm:$0xff]
    %v198 = vld [vmem:[#allocation5 + $0x410] sm:$0xff]
    %v199 = vld [vmem:[#allocation5 + $0x418] sm:$0xff]
    %v200 = vld [vmem:[#allocation5 + $0x420] sm:$0xff]
    %v201 = vld [vmem:[#allocation5 + $0x428] sm:$0xff]
    %v202 = vld [vmem:[#allocation5 + $0x430] sm:$0xff]
    %v203 = vld [vmem:[#allocation5 + $0x438] sm:$0xff]
    %v204 = vld [vmem:[#allocation5 + $0x440] sm:$0xff]
    %v205 = vld [vmem:[#allocation5 + $0x448] sm:$0xff]
    %v206 = vld [vmem:[#allocation5 + $0x450] sm:$0xff]
    %v207 = vld [vmem:[#allocation5 + $0x458] sm:$0xff]
    %v208 = vld [vmem:[#allocation5 + $0x460] sm:$0xff]
    %v209 = vld [vmem:[#allocation5 + $0x468] sm:$0xff]
    %v210 = vld [vmem:[#allocation5 + $0x470] sm:$0xff]
    %v211 = vld [vmem:[#allocation5 + $0x478] sm:$0xff]
    %v212 = vld [vmem:[#allocation5 + $0x480] sm:$0xff]
    %v213 = vld [vmem:[#allocation5 + $0x488] sm:$0xff]
    %v214 = vld [vmem:[#allocation5 + $0x490] sm:$0xff]
    %v215 = vld [vmem:[#allocation5 + $0x498] sm:$0xff]
    %v216 = vld [vmem:[#allocation5 + $0x4a0] sm:$0xff]
    %v217 = vld [vmem:[#allocation5 + $0x4a8] sm:$0xff]
    %v218 = vld [vmem:[#allocation5 + $0x4b0] sm:$0xff]
    %v219 = vld [vmem:[#allocation5 + $0x4b8] sm:$0xff]
    %v220 = vld [vmem:[#allocation5 + $0x4c0] sm:$0xff]
    %v221 = vld [vmem:[#allocation5 + $0x4c8] sm:$0xff]
    %v222 = vld [vmem:[#allocation5 + $0x4d0] sm:$0xff]
    %v223 = vld [vmem:[#allocation5 + $0x4d8] sm:$0xff]
    %v224 = vld [vmem:[#allocation5 + $0x4e0] sm:$0xff]
    %v225 = vld [vmem:[#allocation5 + $0x4e8] sm:$0xff]
    %v226 = vld [vmem:[#allocation5 + $0x4f0] sm:$0xff]
    %v227 = vld [vmem:[#allocation5 + $0x4f8] sm:$0xff]
    %v228 = vld [vmem:[#allocation5 + $0x500] sm:$0xff]
    %v229 = vld [vmem:[#allocation5 + $0x508] sm:$0xff]
    %v230 = vld [vmem:[#allocation5 + $0x510] sm:$0xff]
    %v231 = vld [vmem:[#allocation5 + $0x518] sm:$0xff]
    %v232 = vld [vmem:[#allocation5 + $0x520] sm:$0xff]
    %v233 = vld [vmem:[#allocation5 + $0x528] sm:$0xff]
    %v234 = vld [vmem:[#allocation5 + $0x530] sm:$0xff]
    %v235 = vld [vmem:[#allocation5 + $0x538] sm:$0xff]
    %v236 = vld [vmem:[#allocation5 + $0x540] sm:$0xff]
    %v237 = vld [vmem:[#allocation5 + $0x548] sm:$0xff]
    %v238 = vld [vmem:[#allocation5 + $0x550] sm:$0xff]
    %v239 = vld [vmem:[#allocation5 + $0x558] sm:$0xff]
    %v240 = vld [vmem:[#allocation5 + $0x560] sm:$0xff]
    %v241 = vld [vmem:[#allocation5 + $0x568] sm:$0xff]
    %v242 = vld [vmem:[#allocation5 + $0x570] sm:$0xff]
    %v243 = vld [vmem:[#allocation5 + $0x578] sm:$0xff]
    %v244 = vld [vmem:[#allocation5 + $0x580] sm:$0xff]
    %v245 = vld [vmem:[#allocation5 + $0x588] sm:$0xff]
    %v246 = vld [vmem:[#allocation5 + $0x590] sm:$0xff]
    %v247 = vld [vmem:[#allocation5 + $0x598] sm:$0xff]
    %v248 = vld [vmem:[#allocation5 + $0x5a0] sm:$0xff]
    %v249 = vld [vmem:[#allocation5 + $0x5a8] sm:$0xff]
    %v250 = vld [vmem:[#allocation5 + $0x5b0] sm:$0xff]
    %v251 = vld [vmem:[#allocation5 + $0x5b8] sm:$0xff]
    %v252 = vld [vmem:[#allocation5 + $0x5c0] sm:$0xff]
    %v253 = vld [vmem:[#allocation5 + $0x5c8] sm:$0xff]
    %v254 = vld [vmem:[#allocation5 + $0x5d0] sm:$0xff]
    %v255 = vld [vmem:[#allocation5 + $0x5d8] sm:$0xff]
    %v256 = vld [vmem:[#allocation5 + $0x5e0] sm:$0xff]
    %v257 = vld [vmem:[#allocation5 + $0x5e8] sm:$0xff]
    %v258 = vld [vmem:[#allocation5 + $0x5f0] sm:$0xff]
    %v259 = vld [vmem:[#allocation5 + $0x5f8] sm:$0xff]
    %v260 = vld [vmem:[#allocation5 + $0x600] sm:$0xff]
    %v261 = vld [vmem:[#allocation5 + $0x608] sm:$0xff]
    %v262 = vld [vmem:[#allocation5 + $0x610] sm:$0xff]
    %v263 = vld [vmem:[#allocation5 + $0x618] sm:$0xff]
    %v264 = vld [vmem:[#allocation5 + $0x620] sm:$0xff]
    %v265 = vld [vmem:[#allocation5 + $0x628] sm:$0xff]
    %v266 = vld [vmem:[#allocation5 + $0x630] sm:$0xff]
    %v267 = vld [vmem:[#allocation5 + $0x638] sm:$0xff]
    %v268 = vld [vmem:[#allocation5 + $0x640] sm:$0xff]
    %v269 = vld [vmem:[#allocation5 + $0x648] sm:$0xff]
    %v270 = vld [vmem:[#allocation5 + $0x650] sm:$0xff]
    %v271 = vld [vmem:[#allocation5 + $0x658] sm:$0xff]
    %v272 = vld [vmem:[#allocation5 + $0x660] sm:$0xff]
    %v273 = vld [vmem:[#allocation5 + $0x668] sm:$0xff]
    %v274 = vld [vmem:[#allocation5 + $0x670] sm:$0xff]
    %v275 = vld [vmem:[#allocation5 + $0x678] sm:$0xff]
    %v276 = vld [vmem:[#allocation5 + $0x680] sm:$0xff]
    %v277 = vld [vmem:[#allocation5 + $0x688] sm:$0xff]
    %v278 = vld [vmem:[#allocation5 + $0x690] sm:$0xff]
    %v279 = vld [vmem:[#allocation5 + $0x698] sm:$0xff]
    %v280 = vld [vmem:[#allocation5 + $0x6a0] sm:$0xff]
    %v281 = vld [vmem:[#allocation5 + $0x6a8] sm:$0xff]
    %v282 = vld [vmem:[#allocation5 + $0x6b0] sm:$0xff]
    %v283 = vld [vmem:[#allocation5 + $0x6b8] sm:$0xff]
    %v284 = vld [vmem:[#allocation5 + $0x6c0] sm:$0xff]
    %v285 = vld [vmem:[#allocation5 + $0x6c8] sm:$0xff]
    %v286 = vld [vmem:[#allocation5 + $0x6d0] sm:$0xff]
    %v287 = vld [vmem:[#allocation5 + $0x6d8] sm:$0xff]
    %v288 = vld [vmem:[#allocation5 + $0x6e0] sm:$0xff]
    %v289 = vld [vmem:[#allocation5 + $0x6e8] sm:$0xff]
    %v290 = vld [vmem:[#allocation5 + $0x6f0] sm:$0xff]
    %v291 = vld [vmem:[#allocation5 + $0x6f8] sm:$0xff]
    %v292 = vld [vmem:[#allocation5 + $0x700] sm:$0xff]
    %v293 = vld [vmem:[#allocation5 + $0x708] sm:$0xff]
    %v294 = vld [vmem:[#allocation5 + $0x710] sm:$0xff]
    %v295 = vld [vmem:[#allocation5 + $0x718] sm:$0xff]
    %v296 = vld [vmem:[#allocation5 + $0x720] sm:$0xff]
    %v297 = vld [vmem:[#allocation5 + $0x728] sm:$0xff]
    %v298 = vld [vmem:[#allocation5 + $0x730] sm:$0xff]
    %v299 = vld [vmem:[#allocation5 + $0x738] sm:$0xff]
    %v300 = vld [vmem:[#allocation5 + $0x740] sm:$0xff]
    %v301 = vld [vmem:[#allocation5 + $0x748] sm:$0xff]
    %v302 = vld [vmem:[#allocation5 + $0x750] sm:$0xff]
    %v303 = vld [vmem:[#allocation5 + $0x758] sm:$0xff]
    %v304 = vld [vmem:[#allocation5 + $0x760] sm:$0xff]
    %v305 = vld [vmem:[#allocation5 + $0x768] sm:$0xff]
    %v306 = vld [vmem:[#allocation5 + $0x770] sm:$0xff]
    %v307 = vld [vmem:[#allocation5 + $0x778] sm:$0xff]
    %v308 = vld [vmem:[#allocation5 + $0x780] sm:$0xff]
    %v309 = vld [vmem:[#allocation5 + $0x788] sm:$0xff]
    %v310 = vld [vmem:[#allocation5 + $0x790] sm:$0xff]
    %v311 = vld [vmem:[#allocation5 + $0x798] sm:$0xff]
    %v312 = vld [vmem:[#allocation5 + $0x7a0] sm:$0xff]
    %v313 = vld [vmem:[#allocation5 + $0x7a8] sm:$0xff]
    %v314 = vld [vmem:[#allocation5 + $0x7b0] sm:$0xff]
    %v315 = vld [vmem:[#allocation5 + $0x7b8] sm:$0xff]
    %v316 = vld [vmem:[#allocation5 + $0x7c0] sm:$0xff]
    %v317 = vld [vmem:[#allocation5 + $0x7c8] sm:$0xff]
    %v318 = vld [vmem:[#allocation5 + $0x7d0] sm:$0xff]
    %v319 = vld [vmem:[#allocation5 + $0x7d8] sm:$0xff]
    %v320 = vld [vmem:[#allocation5 + $0x7e0] sm:$0xff]
    %v321 = vld [vmem:[#allocation5 + $0x7e8] sm:$0xff]
    %v322 = vld [vmem:[#allocation5 + $0x7f0] sm:$0xff]
    %v323 = vld [vmem:[#allocation5 + $0x7f8] sm:$0xff]
    %v324 = vld [vmem:[%s2] sm:$0x3]
    %v326 = vlaneseq
    %v327 = vshrl.u32 %v326, 7
    %v328 = vsub.s32 0, %v327
    %v329 = vrot.slane %v324, %v328
    %v330 = vlaneseq
    %v331 = vshrl.u32 %v330, 7
    %v332 = vsub.s32 1, %v331
    %v333 = vrot.slane %v324, %v332
    %v344 = vunpack.c.l.b16 %v60
    %v345 = vunpack.c.h.b16 %v60
    %v346 = vunpack.c.l.b16 %v61
    %v347 = vunpack.c.h.b16 %v61
    %v348 = vunpack.c.l.b16 %v62
    %v349 = vunpack.c.h.b16 %v62
    %v350 = vunpack.c.l.b16 %v63
    %v351 = vunpack.c.h.b16 %v63
    %v352 = vunpack.c.l.b16 %v64
    %v353 = vunpack.c.h.b16 %v64
    %v354 = vunpack.c.l.b16 %v65
    %v355 = vunpack.c.h.b16 %v65
    %v356 = vunpack.c.l.b16 %v66
    %v357 = vunpack.c.h.b16 %v66
    %v358 = vunpack.c.l.b16 %v67
    %v359 = vunpack.c.h.b16 %v67
    %v360 = vpack.c.b16 %v344, %v344
    %v361 = vpack.c.b16 %v345, %v345
    %v362 = vpack.c.b16 %v346, %v346
    %v363 = vpack.c.b16 %v347, %v347
    %v364 = vpack.c.b16 %v348, %v348
    %v365 = vpack.c.b16 %v349, %v349
    %v366 = vpack.c.b16 %v350, %v350
    %v367 = vpack.c.b16 %v351, %v351
    %v368 = vpack.c.b16 %v352, %v352
    %v369 = vpack.c.b16 %v353, %v353
    %v370 = vpack.c.b16 %v354, %v354
    %v371 = vpack.c.b16 %v355, %v355
    %v372 = vpack.c.b16 %v356, %v356
    %v373 = vpack.c.b16 %v357, %v357
    %v374 = vpack.c.b16 %v358, %v358
    %v375 = vpack.c.b16 %v359, %v359
    %v648 = vunpack.c.l.b16 %v68
    %v649 = vunpack.c.h.b16 %v68
    %v650 = vunpack.c.l.b16 %v69
    %v651 = vunpack.c.h.b16 %v69
    %v652 = vunpack.c.l.b16 %v70
    %v653 = vunpack.c.h.b16 %v70
    %v654 = vunpack.c.l.b16 %v71
    %v655 = vunpack.c.h.b16 %v71
    %v656 = vunpack.c.l.b16 %v72
    %v657 = vunpack.c.h.b16 %v72
    %v658 = vunpack.c.l.b16 %v73
    %v659 = vunpack.c.h.b16 %v73
    %v660 = vunpack.c.l.b16 %v74
    %v661 = vunpack.c.h.b16 %v74
    %v662 = vunpack.c.l.b16 %v75
    %v663 = vunpack.c.h.b16 %v75
    %v664 = vunpack.c.l.b16 %v76
    %v665 = vunpack.c.h.b16 %v76
    %v666 = vunpack.c.l.b16 %v77
    %v667 = vunpack.c.h.b16 %v77
    %v668 = vunpack.c.l.b16 %v78
    %v669 = vunpack.c.h.b16 %v78
    %v670 = vunpack.c.l.b16 %v79
    %v671 = vunpack.c.h.b16 %v79
    %v672 = vunpack.c.l.b16 %v80
    %v673 = vunpack.c.h.b16 %v80
    %v674 = vunpack.c.l.b16 %v81
    %v675 = vunpack.c.h.b16 %v81
    %v676 = vunpack.c.l.b16 %v82
    %v677 = vunpack.c.h.b16 %v82
    %v678 = vunpack.c.l.b16 %v83
    %v679 = vunpack.c.h.b16 %v83
    %v680 = vunpack.c.l.b16 %v84
    %v681 = vunpack.c.h.b16 %v84
    %v682 = vunpack.c.l.b16 %v85
    %v683 = vunpack.c.h.b16 %v85
    %v684 = vunpack.c.l.b16 %v86
    %v685 = vunpack.c.h.b16 %v86
    %v686 = vunpack.c.l.b16 %v87
    %v687 = vunpack.c.h.b16 %v87
    %v688 = vunpack.c.l.b16 %v88
    %v689 = vunpack.c.h.b16 %v88
    %v690 = vunpack.c.l.b16 %v89
    %v691 = vunpack.c.h.b16 %v89
    %v692 = vunpack.c.l.b16 %v90
    %v693 = vunpack.c.h.b16 %v90
    %v694 = vunpack.c.l.b16 %v91
    %v695 = vunpack.c.h.b16 %v91
    %v696 = vunpack.c.l.b16 %v92
    %v697 = vunpack.c.h.b16 %v92
    %v698 = vunpack.c.l.b16 %v93
    %v699 = vunpack.c.h.b16 %v93
    %v700 = vunpack.c.l.b16 %v94
    %v701 = vunpack.c.h.b16 %v94
    %v702 = vunpack.c.l.b16 %v95
    %v703 = vunpack.c.h.b16 %v95
    %v704 = vunpack.c.l.b16 %v96
    %v705 = vunpack.c.h.b16 %v96
    %v706 = vunpack.c.l.b16 %v97
    %v707 = vunpack.c.h.b16 %v97
    %v708 = vunpack.c.l.b16 %v98
    %v709 = vunpack.c.h.b16 %v98
    %v710 = vunpack.c.l.b16 %v99
    %v711 = vunpack.c.h.b16 %v99
    %v712 = vunpack.c.l.b16 %v100
    %v713 = vunpack.c.h.b16 %v100
    %v714 = vunpack.c.l.b16 %v101
    %v715 = vunpack.c.h.b16 %v101
    %v716 = vunpack.c.l.b16 %v102
    %v717 = vunpack.c.h.b16 %v102
    %v718 = vunpack.c.l.b16 %v103
    %v719 = vunpack.c.h.b16 %v103
    %v720 = vunpack.c.l.b16 %v104
    %v721 = vunpack.c.h.b16 %v104
    %v722 = vunpack.c.l.b16 %v105
    %v723 = vunpack.c.h.b16 %v105
    %v724 = vunpack.c.l.b16 %v106
    %v725 = vunpack.c.h.b16 %v106
    %v726 = vunpack.c.l.b16 %v107
    %v727 = vunpack.c.h.b16 %v107
    %v728 = vunpack.c.l.b16 %v108
    %v729 = vunpack.c.h.b16 %v108
    %v730 = vunpack.c.l.b16 %v109
    %v731 = vunpack.c.h.b16 %v109
    %v732 = vunpack.c.l.b16 %v110
    %v733 = vunpack.c.h.b16 %v110
    %v734 = vunpack.c.l.b16 %v111
    %v735 = vunpack.c.h.b16 %v111
    %v736 = vunpack.c.l.b16 %v112
    %v737 = vunpack.c.h.b16 %v112
    %v738 = vunpack.c.l.b16 %v113
    %v739 = vunpack.c.h.b16 %v113
    %v740 = vunpack.c.l.b16 %v114
    %v741 = vunpack.c.h.b16 %v114
    %v742 = vunpack.c.l.b16 %v115
    %v743 = vunpack.c.h.b16 %v115
    %v744 = vunpack.c.l.b16 %v116
    %v745 = vunpack.c.h.b16 %v116
    %v746 = vunpack.c.l.b16 %v117
    %v747 = vunpack.c.h.b16 %v117
    %v748 = vunpack.c.l.b16 %v118
    %v749 = vunpack.c.h.b16 %v118
    %v750 = vunpack.c.l.b16 %v119
    %v751 = vunpack.c.h.b16 %v119
    %v752 = vunpack.c.l.b16 %v120
    %v753 = vunpack.c.h.b16 %v120
    %v754 = vunpack.c.l.b16 %v121
    %v755 = vunpack.c.h.b16 %v121
    %v756 = vunpack.c.l.b16 %v122
    %v757 = vunpack.c.h.b16 %v122
    %v758 = vunpack.c.l.b16 %v123
    %v759 = vunpack.c.h.b16 %v123
    %v760 = vunpack.c.l.b16 %v124
    %v761 = vunpack.c.h.b16 %v124
    %v762 = vunpack.c.l.b16 %v125
    %v763 = vunpack.c.h.b16 %v125
    %v764 = vunpack.c.l.b16 %v126
    %v765 = vunpack.c.h.b16 %v126
    %v766 = vunpack.c.l.b16 %v127
    %v767 = vunpack.c.h.b16 %v127
    %v768 = vunpack.c.l.b16 %v128
    %v769 = vunpack.c.h.b16 %v128
    %v770 = vunpack.c.l.b16 %v129
    %v771 = vunpack.c.h.b16 %v129
    %v772 = vunpack.c.l.b16 %v130
    %v773 = vunpack.c.h.b16 %v130
    %v774 = vunpack.c.l.b16 %v131
    %v775 = vunpack.c.h.b16 %v131
    %v776 = vunpack.c.l.b16 %v132
    %v777 = vunpack.c.h.b16 %v132
    %v778 = vunpack.c.l.b16 %v133
    %v779 = vunpack.c.h.b16 %v133
    %v780 = vunpack.c.l.b16 %v134
    %v781 = vunpack.c.h.b16 %v134
    %v782 = vunpack.c.l.b16 %v135
    %v783 = vunpack.c.h.b16 %v135
    %v784 = vunpack.c.l.b16 %v136
    %v785 = vunpack.c.h.b16 %v136
    %v786 = vunpack.c.l.b16 %v137
    %v787 = vunpack.c.h.b16 %v137
    %v788 = vunpack.c.l.b16 %v138
    %v789 = vunpack.c.h.b16 %v138
    %v790 = vunpack.c.l.b16 %v139
    %v791 = vunpack.c.h.b16 %v139
    %v792 = vunpack.c.l.b16 %v140
    %v793 = vunpack.c.h.b16 %v140
    %v794 = vunpack.c.l.b16 %v141
    %v795 = vunpack.c.h.b16 %v141
    %v796 = vunpack.c.l.b16 %v142
    %v797 = vunpack.c.h.b16 %v142
    %v798 = vunpack.c.l.b16 %v143
    %v799 = vunpack.c.h.b16 %v143
    %v800 = vunpack.c.l.b16 %v144
    %v801 = vunpack.c.h.b16 %v144
    %v802 = vunpack.c.l.b16 %v145
    %v803 = vunpack.c.h.b16 %v145
    %v804 = vunpack.c.l.b16 %v146
    %v805 = vunpack.c.h.b16 %v146
    %v806 = vunpack.c.l.b16 %v147
    %v807 = vunpack.c.h.b16 %v147
    %v808 = vunpack.c.l.b16 %v148
    %v809 = vunpack.c.h.b16 %v148
    %v810 = vunpack.c.l.b16 %v149
    %v811 = vunpack.c.h.b16 %v149
    %v812 = vunpack.c.l.b16 %v150
    %v813 = vunpack.c.h.b16 %v150
    %v814 = vunpack.c.l.b16 %v151
    %v815 = vunpack.c.h.b16 %v151
    %v816 = vunpack.c.l.b16 %v152
    %v817 = vunpack.c.h.b16 %v152
    %v818 = vunpack.c.l.b16 %v153
    %v819 = vunpack.c.h.b16 %v153
    %v820 = vunpack.c.l.b16 %v154
    %v821 = vunpack.c.h.b16 %v154
    %v822 = vunpack.c.l.b16 %v155
    %v823 = vunpack.c.h.b16 %v155
    %v824 = vunpack.c.l.b16 %v156
    %v825 = vunpack.c.h.b16 %v156
    %v826 = vunpack.c.l.b16 %v157
    %v827 = vunpack.c.h.b16 %v157
    %v828 = vunpack.c.l.b16 %v158
    %v829 = vunpack.c.h.b16 %v158
    %v830 = vunpack.c.l.b16 %v159
    %v831 = vunpack.c.h.b16 %v159
    %v832 = vunpack.c.l.b16 %v160
    %v833 = vunpack.c.h.b16 %v160
    %v834 = vunpack.c.l.b16 %v161
    %v835 = vunpack.c.h.b16 %v161
    %v836 = vunpack.c.l.b16 %v162
    %v837 = vunpack.c.h.b16 %v162
    %v838 = vunpack.c.l.b16 %v163
    %v839 = vunpack.c.h.b16 %v163
    %v840 = vunpack.c.l.b16 %v164
    %v841 = vunpack.c.h.b16 %v164
    %v842 = vunpack.c.l.b16 %v165
    %v843 = vunpack.c.h.b16 %v165
    %v844 = vunpack.c.l.b16 %v166
    %v845 = vunpack.c.h.b16 %v166
    %v846 = vunpack.c.l.b16 %v167
    %v847 = vunpack.c.h.b16 %v167
    %v848 = vunpack.c.l.b16 %v168
    %v849 = vunpack.c.h.b16 %v168
    %v850 = vunpack.c.l.b16 %v169
    %v851 = vunpack.c.h.b16 %v169
    %v852 = vunpack.c.l.b16 %v170
    %v853 = vunpack.c.h.b16 %v170
    %v854 = vunpack.c.l.b16 %v171
    %v855 = vunpack.c.h.b16 %v171
    %v856 = vunpack.c.l.b16 %v172
    %v857 = vunpack.c.h.b16 %v172
    %v858 = vunpack.c.l.b16 %v173
    %v859 = vunpack.c.h.b16 %v173
    %v860 = vunpack.c.l.b16 %v174
    %v861 = vunpack.c.h.b16 %v174
    %v862 = vunpack.c.l.b16 %v175
    %v863 = vunpack.c.h.b16 %v175
    %v864 = vunpack.c.l.b16 %v176
    %v865 = vunpack.c.h.b16 %v176
    %v866 = vunpack.c.l.b16 %v177
    %v867 = vunpack.c.h.b16 %v177
    %v868 = vunpack.c.l.b16 %v178
    %v869 = vunpack.c.h.b16 %v178
    %v870 = vunpack.c.l.b16 %v179
    %v871 = vunpack.c.h.b16 %v179
    %v872 = vunpack.c.l.b16 %v180
    %v873 = vunpack.c.h.b16 %v180
    %v874 = vunpack.c.l.b16 %v181
    %v875 = vunpack.c.h.b16 %v181
    %v876 = vunpack.c.l.b16 %v182
    %v877 = vunpack.c.h.b16 %v182
    %v878 = vunpack.c.l.b16 %v183
    %v879 = vunpack.c.h.b16 %v183
    %v880 = vunpack.c.l.b16 %v184
    %v881 = vunpack.c.h.b16 %v184
    %v882 = vunpack.c.l.b16 %v185
    %v883 = vunpack.c.h.b16 %v185
    %v884 = vunpack.c.l.b16 %v186
    %v885 = vunpack.c.h.b16 %v186
    %v886 = vunpack.c.l.b16 %v187
    %v887 = vunpack.c.h.b16 %v187
    %v888 = vunpack.c.l.b16 %v188
    %v889 = vunpack.c.h.b16 %v188
    %v890 = vunpack.c.l.b16 %v189
    %v891 = vunpack.c.h.b16 %v189
    %v892 = vunpack.c.l.b16 %v190
    %v893 = vunpack.c.h.b16 %v190
    %v894 = vunpack.c.l.b16 %v191
    %v895 = vunpack.c.h.b16 %v191
    %v896 = vunpack.c.l.b16 %v192
    %v897 = vunpack.c.h.b16 %v192
    %v898 = vunpack.c.l.b16 %v193
    %v899 = vunpack.c.h.b16 %v193
    %v900 = vunpack.c.l.b16 %v194
    %v901 = vunpack.c.h.b16 %v194
    %v902 = vunpack.c.l.b16 %v195
    %v903 = vunpack.c.h.b16 %v195
    %v904 = vunpack.c.l.b16 %v196
    %v905 = vunpack.c.h.b16 %v196
    %v906 = vunpack.c.l.b16 %v197
    %v907 = vunpack.c.h.b16 %v197
    %v908 = vunpack.c.l.b16 %v198
    %v909 = vunpack.c.h.b16 %v198
    %v910 = vunpack.c.l.b16 %v199
    %v911 = vunpack.c.h.b16 %v199
    %v912 = vunpack.c.l.b16 %v200
    %v913 = vunpack.c.h.b16 %v200
    %v914 = vunpack.c.l.b16 %v201
    %v915 = vunpack.c.h.b16 %v201
    %v916 = vunpack.c.l.b16 %v202
    %v917 = vunpack.c.h.b16 %v202
    %v918 = vunpack.c.l.b16 %v203
    %v919 = vunpack.c.h.b16 %v203
    %v920 = vunpack.c.l.b16 %v204
    %v921 = vunpack.c.h.b16 %v204
    %v922 = vunpack.c.l.b16 %v205
    %v923 = vunpack.c.h.b16 %v205
    %v924 = vunpack.c.l.b16 %v206
    %v925 = vunpack.c.h.b16 %v206
    %v926 = vunpack.c.l.b16 %v207
    %v927 = vunpack.c.h.b16 %v207
    %v928 = vunpack.c.l.b16 %v208
    %v929 = vunpack.c.h.b16 %v208
    %v930 = vunpack.c.l.b16 %v209
    %v931 = vunpack.c.h.b16 %v209
    %v932 = vunpack.c.l.b16 %v210
    %v933 = vunpack.c.h.b16 %v210
    %v934 = vunpack.c.l.b16 %v211
    %v935 = vunpack.c.h.b16 %v211
    %v936 = vunpack.c.l.b16 %v212
    %v937 = vunpack.c.h.b16 %v212
    %v938 = vunpack.c.l.b16 %v213
    %v939 = vunpack.c.h.b16 %v213
    %v940 = vunpack.c.l.b16 %v214
    %v941 = vunpack.c.h.b16 %v214
    %v942 = vunpack.c.l.b16 %v215
    %v943 = vunpack.c.h.b16 %v215
    %v944 = vunpack.c.l.b16 %v216
    %v945 = vunpack.c.h.b16 %v216
    %v946 = vunpack.c.l.b16 %v217
    %v947 = vunpack.c.h.b16 %v217
    %v948 = vunpack.c.l.b16 %v218
    %v949 = vunpack.c.h.b16 %v218
    %v950 = vunpack.c.l.b16 %v219
    %v951 = vunpack.c.h.b16 %v219
    %v952 = vunpack.c.l.b16 %v220
    %v953 = vunpack.c.h.b16 %v220
    %v954 = vunpack.c.l.b16 %v221
    %v955 = vunpack.c.h.b16 %v221
    %v956 = vunpack.c.l.b16 %v222
    %v957 = vunpack.c.h.b16 %v222
    %v958 = vunpack.c.l.b16 %v223
    %v959 = vunpack.c.h.b16 %v223
    %v960 = vunpack.c.l.b16 %v224
    %v961 = vunpack.c.h.b16 %v224
    %v962 = vunpack.c.l.b16 %v225
    %v963 = vunpack.c.h.b16 %v225
    %v964 = vunpack.c.l.b16 %v226
    %v965 = vunpack.c.h.b16 %v226
    %v966 = vunpack.c.l.b16 %v227
    %v967 = vunpack.c.h.b16 %v227
    %v968 = vunpack.c.l.b16 %v228
    %v969 = vunpack.c.h.b16 %v228
    %v970 = vunpack.c.l.b16 %v229
    %v971 = vunpack.c.h.b16 %v229
    %v972 = vunpack.c.l.b16 %v230
    %v973 = vunpack.c.h.b16 %v230
    %v974 = vunpack.c.l.b16 %v231
    %v975 = vunpack.c.h.b16 %v231
    %v976 = vunpack.c.l.b16 %v232
    %v977 = vunpack.c.h.b16 %v232
    %v978 = vunpack.c.l.b16 %v233
    %v979 = vunpack.c.h.b16 %v233
    %v980 = vunpack.c.l.b16 %v234
    %v981 = vunpack.c.h.b16 %v234
    %v982 = vunpack.c.l.b16 %v235
    %v983 = vunpack.c.h.b16 %v235
    %v984 = vunpack.c.l.b16 %v236
    %v985 = vunpack.c.h.b16 %v236
    %v986 = vunpack.c.l.b16 %v237
    %v987 = vunpack.c.h.b16 %v237
    %v988 = vunpack.c.l.b16 %v238
    %v989 = vunpack.c.h.b16 %v238
    %v990 = vunpack.c.l.b16 %v239
    %v991 = vunpack.c.h.b16 %v239
    %v992 = vunpack.c.l.b16 %v240
    %v993 = vunpack.c.h.b16 %v240
    %v994 = vunpack.c.l.b16 %v241
    %v995 = vunpack.c.h.b16 %v241
    %v996 = vunpack.c.l.b16 %v242
    %v997 = vunpack.c.h.b16 %v242
    %v998 = vunpack.c.l.b16 %v243
    %v999 = vunpack.c.h.b16 %v243
    %v1000 = vunpack.c.l.b16 %v244
    %v1001 = vunpack.c.h.b16 %v244
    %v1002 = vunpack.c.l.b16 %v245
    %v1003 = vunpack.c.h.b16 %v245
    %v1004 = vunpack.c.l.b16 %v246
    %v1005 = vunpack.c.h.b16 %v246
    %v1006 = vunpack.c.l.b16 %v247
    %v1007 = vunpack.c.h.b16 %v247
    %v1008 = vunpack.c.l.b16 %v248
    %v1009 = vunpack.c.h.b16 %v248
    %v1010 = vunpack.c.l.b16 %v249
    %v1011 = vunpack.c.h.b16 %v249
    %v1012 = vunpack.c.l.b16 %v250
    %v1013 = vunpack.c.h.b16 %v250
    %v1014 = vunpack.c.l.b16 %v251
    %v1015 = vunpack.c.h.b16 %v251
    %v1016 = vunpack.c.l.b16 %v252
    %v1017 = vunpack.c.h.b16 %v252
    %v1018 = vunpack.c.l.b16 %v253
    %v1019 = vunpack.c.h.b16 %v253
    %v1020 = vunpack.c.l.b16 %v254
    %v1021 = vunpack.c.h.b16 %v254
    %v1022 = vunpack.c.l.b16 %v255
    %v1023 = vunpack.c.h.b16 %v255
    %v1024 = vunpack.c.l.b16 %v256
    %v1025 = vunpack.c.h.b16 %v256
    %v1026 = vunpack.c.l.b16 %v257
    %v1027 = vunpack.c.h.b16 %v257
    %v1028 = vunpack.c.l.b16 %v258
    %v1029 = vunpack.c.h.b16 %v258
    %v1030 = vunpack.c.l.b16 %v259
    %v1031 = vunpack.c.h.b16 %v259
    %v1032 = vunpack.c.l.b16 %v260
    %v1033 = vunpack.c.h.b16 %v260
    %v1034 = vunpack.c.l.b16 %v261
    %v1035 = vunpack.c.h.b16 %v261
    %v1036 = vunpack.c.l.b16 %v262
    %v1037 = vunpack.c.h.b16 %v262
    %v1038 = vunpack.c.l.b16 %v263
    %v1039 = vunpack.c.h.b16 %v263
    %v1040 = vunpack.c.l.b16 %v264
    %v1041 = vunpack.c.h.b16 %v264
    %v1042 = vunpack.c.l.b16 %v265
    %v1043 = vunpack.c.h.b16 %v265
    %v1044 = vunpack.c.l.b16 %v266
    %v1045 = vunpack.c.h.b16 %v266
    %v1046 = vunpack.c.l.b16 %v267
    %v1047 = vunpack.c.h.b16 %v267
    %v1048 = vunpack.c.l.b16 %v268
    %v1049 = vunpack.c.h.b16 %v268
    %v1050 = vunpack.c.l.b16 %v269
    %v1051 = vunpack.c.h.b16 %v269
    %v1052 = vunpack.c.l.b16 %v270
    %v1053 = vunpack.c.h.b16 %v270
    %v1054 = vunpack.c.l.b16 %v271
    %v1055 = vunpack.c.h.b16 %v271
    %v1056 = vunpack.c.l.b16 %v272
    %v1057 = vunpack.c.h.b16 %v272
    %v1058 = vunpack.c.l.b16 %v273
    %v1059 = vunpack.c.h.b16 %v273
    %v1060 = vunpack.c.l.b16 %v274
    %v1061 = vunpack.c.h.b16 %v274
    %v1062 = vunpack.c.l.b16 %v275
    %v1063 = vunpack.c.h.b16 %v275
    %v1064 = vunpack.c.l.b16 %v276
    %v1065 = vunpack.c.h.b16 %v276
    %v1066 = vunpack.c.l.b16 %v277
    %v1067 = vunpack.c.h.b16 %v277
    %v1068 = vunpack.c.l.b16 %v278
    %v1069 = vunpack.c.h.b16 %v278
    %v1070 = vunpack.c.l.b16 %v279
    %v1071 = vunpack.c.h.b16 %v279
    %v1072 = vunpack.c.l.b16 %v280
    %v1073 = vunpack.c.h.b16 %v280
    %v1074 = vunpack.c.l.b16 %v281
    %v1075 = vunpack.c.h.b16 %v281
    %v1076 = vunpack.c.l.b16 %v282
    %v1077 = vunpack.c.h.b16 %v282
    %v1078 = vunpack.c.l.b16 %v283
    %v1079 = vunpack.c.h.b16 %v283
    %v1080 = vunpack.c.l.b16 %v284
    %v1081 = vunpack.c.h.b16 %v284
    %v1082 = vunpack.c.l.b16 %v285
    %v1083 = vunpack.c.h.b16 %v285
    %v1084 = vunpack.c.l.b16 %v286
    %v1085 = vunpack.c.h.b16 %v286
    %v1086 = vunpack.c.l.b16 %v287
    %v1087 = vunpack.c.h.b16 %v287
    %v1088 = vunpack.c.l.b16 %v288
    %v1089 = vunpack.c.h.b16 %v288
    %v1090 = vunpack.c.l.b16 %v289
    %v1091 = vunpack.c.h.b16 %v289
    %v1092 = vunpack.c.l.b16 %v290
    %v1093 = vunpack.c.h.b16 %v290
    %v1094 = vunpack.c.l.b16 %v291
    %v1095 = vunpack.c.h.b16 %v291
    %v1096 = vunpack.c.l.b16 %v292
    %v1097 = vunpack.c.h.b16 %v292
    %v1098 = vunpack.c.l.b16 %v293
    %v1099 = vunpack.c.h.b16 %v293
    %v1100 = vunpack.c.l.b16 %v294
    %v1101 = vunpack.c.h.b16 %v294
    %v1102 = vunpack.c.l.b16 %v295
    %v1103 = vunpack.c.h.b16 %v295
    %v1104 = vunpack.c.l.b16 %v296
    %v1105 = vunpack.c.h.b16 %v296
    %v1106 = vunpack.c.l.b16 %v297
    %v1107 = vunpack.c.h.b16 %v297
    %v1108 = vunpack.c.l.b16 %v298
    %v1109 = vunpack.c.h.b16 %v298
    %v1110 = vunpack.c.l.b16 %v299
    %v1111 = vunpack.c.h.b16 %v299
    %v1112 = vunpack.c.l.b16 %v300
    %v1113 = vunpack.c.h.b16 %v300
    %v1114 = vunpack.c.l.b16 %v301
    %v1115 = vunpack.c.h.b16 %v301
    %v1116 = vunpack.c.l.b16 %v302
    %v1117 = vunpack.c.h.b16 %v302
    %v1118 = vunpack.c.l.b16 %v303
    %v1119 = vunpack.c.h.b16 %v303
    %v1120 = vunpack.c.l.b16 %v304
    %v1121 = vunpack.c.h.b16 %v304
    %v1122 = vunpack.c.l.b16 %v305
    %v1123 = vunpack.c.h.b16 %v305
    %v1124 = vunpack.c.l.b16 %v306
    %v1125 = vunpack.c.h.b16 %v306
    %v1126 = vunpack.c.l.b16 %v307
    %v1127 = vunpack.c.h.b16 %v307
    %v1128 = vunpack.c.l.b16 %v308
    %v1129 = vunpack.c.h.b16 %v308
    %v1130 = vunpack.c.l.b16 %v309
    %v1131 = vunpack.c.h.b16 %v309
    %v1132 = vunpack.c.l.b16 %v310
    %v1133 = vunpack.c.h.b16 %v310
    %v1134 = vunpack.c.l.b16 %v311
    %v1135 = vunpack.c.h.b16 %v311
    %v1136 = vunpack.c.l.b16 %v312
    %v1137 = vunpack.c.h.b16 %v312
    %v1138 = vunpack.c.l.b16 %v313
    %v1139 = vunpack.c.h.b16 %v313
    %v1140 = vunpack.c.l.b16 %v314
    %v1141 = vunpack.c.h.b16 %v314
    %v1142 = vunpack.c.l.b16 %v315
    %v1143 = vunpack.c.h.b16 %v315
    %v1144 = vunpack.c.l.b16 %v316
    %v1145 = vunpack.c.h.b16 %v316
    %v1146 = vunpack.c.l.b16 %v317
    %v1147 = vunpack.c.h.b16 %v317
    %v1148 = vunpack.c.l.b16 %v318
    %v1149 = vunpack.c.h.b16 %v318
    %v1150 = vunpack.c.l.b16 %v319
    %v1151 = vunpack.c.h.b16 %v319
    %v1152 = vunpack.c.l.b16 %v320
    %v1153 = vunpack.c.h.b16 %v320
    %v1154 = vunpack.c.l.b16 %v321
    %v1155 = vunpack.c.h.b16 %v321
    %v1156 = vunpack.c.l.b16 %v322
    %v1157 = vunpack.c.h.b16 %v322
    %v1158 = vunpack.c.l.b16 %v323
    %v1159 = vunpack.c.h.b16 %v323
    %v1160 = vpack.c.b16 %v650, %v648
    %v1161 = vpack.c.b16 %v651, %v649
    %v1162 = vpack.c.b16 %v654, %v652
    %v1163 = vpack.c.b16 %v655, %v653
    %v1164 = vpack.c.b16 %v658, %v656
    %v1165 = vpack.c.b16 %v659, %v657
    %v1166 = vpack.c.b16 %v662, %v660
    %v1167 = vpack.c.b16 %v663, %v661
    %v1168 = vpack.c.b16 %v666, %v664
    %v1169 = vpack.c.b16 %v667, %v665
    %v1170 = vpack.c.b16 %v670, %v668
    %v1171 = vpack.c.b16 %v671, %v669
    %v1172 = vpack.c.b16 %v674, %v672
    %v1173 = vpack.c.b16 %v675, %v673
    %v1174 = vpack.c.b16 %v678, %v676
    %v1175 = vpack.c.b16 %v679, %v677
    %v1176 = vpack.c.b16 %v682, %v680
    %v1177 = vpack.c.b16 %v683, %v681
    %v1178 = vpack.c.b16 %v686, %v684
    %v1179 = vpack.c.b16 %v687, %v685
    %v1180 = vpack.c.b16 %v690, %v688
    %v1181 = vpack.c.b16 %v691, %v689
    %v1182 = vpack.c.b16 %v694, %v692
    %v1183 = vpack.c.b16 %v695, %v693
    %v1184 = vpack.c.b16 %v698, %v696
    %v1185 = vpack.c.b16 %v699, %v697
    %v1186 = vpack.c.b16 %v702, %v700
    %v1187 = vpack.c.b16 %v703, %v701
    %v1188 = vpack.c.b16 %v706, %v704
    %v1189 = vpack.c.b16 %v707, %v705
    %v1190 = vpack.c.b16 %v710, %v708
    %v1191 = vpack.c.b16 %v711, %v709
    %v1192 = vpack.c.b16 %v714, %v712
    %v1193 = vpack.c.b16 %v715, %v713
    %v1194 = vpack.c.b16 %v718, %v716
    %v1195 = vpack.c.b16 %v719, %v717
    %v1196 = vpack.c.b16 %v722, %v720
    %v1197 = vpack.c.b16 %v723, %v721
    %v1198 = vpack.c.b16 %v726, %v724
    %v1199 = vpack.c.b16 %v727, %v725
    %v1200 = vpack.c.b16 %v730, %v728
    %v1201 = vpack.c.b16 %v731, %v729
    %v1202 = vpack.c.b16 %v734, %v732
    %v1203 = vpack.c.b16 %v735, %v733
    %v1204 = vpack.c.b16 %v738, %v736
    %v1205 = vpack.c.b16 %v739, %v737
    %v1206 = vpack.c.b16 %v742, %v740
    %v1207 = vpack.c.b16 %v743, %v741
    %v1208 = vpack.c.b16 %v746, %v744
    %v1209 = vpack.c.b16 %v747, %v745
    %v1210 = vpack.c.b16 %v750, %v748
    %v1211 = vpack.c.b16 %v751, %v749
    %v1212 = vpack.c.b16 %v754, %v752
    %v1213 = vpack.c.b16 %v755, %v753
    %v1214 = vpack.c.b16 %v758, %v756
    %v1215 = vpack.c.b16 %v759, %v757
    %v1216 = vpack.c.b16 %v762, %v760
    %v1217 = vpack.c.b16 %v763, %v761
    %v1218 = vpack.c.b16 %v766, %v764
    %v1219 = vpack.c.b16 %v767, %v765
    %v1220 = vpack.c.b16 %v770, %v768
    %v1221 = vpack.c.b16 %v771, %v769
    %v1222 = vpack.c.b16 %v774, %v772
    %v1223 = vpack.c.b16 %v775, %v773
    %v1224 = vpack.c.b16 %v778, %v776
    %v1225 = vpack.c.b16 %v779, %v777
    %v1226 = vpack.c.b16 %v782, %v780
    %v1227 = vpack.c.b16 %v783, %v781
    %v1228 = vpack.c.b16 %v786, %v784
    %v1229 = vpack.c.b16 %v787, %v785
    %v1230 = vpack.c.b16 %v790, %v788
    %v1231 = vpack.c.b16 %v791, %v789
    %v1232 = vpack.c.b16 %v794, %v792
    %v1233 = vpack.c.b16 %v795, %v793
    %v1234 = vpack.c.b16 %v798, %v796
    %v1235 = vpack.c.b16 %v799, %v797
    %v1236 = vpack.c.b16 %v802, %v800
    %v1237 = vpack.c.b16 %v803, %v801
    %v1238 = vpack.c.b16 %v806, %v804
    %v1239 = vpack.c.b16 %v807, %v805
    %v1240 = vpack.c.b16 %v810, %v808
    %v1241 = vpack.c.b16 %v811, %v809
    %v1242 = vpack.c.b16 %v814, %v812
    %v1243 = vpack.c.b16 %v815, %v813
    %v1244 = vpack.c.b16 %v818, %v816
    %v1245 = vpack.c.b16 %v819, %v817
    %v1246 = vpack.c.b16 %v822, %v820
    %v1247 = vpack.c.b16 %v823, %v821
    %v1248 = vpack.c.b16 %v826, %v824
    %v1249 = vpack.c.b16 %v827, %v825
    %v1250 = vpack.c.b16 %v830, %v828
    %v1251 = vpack.c.b16 %v831, %v829
    %v1252 = vpack.c.b16 %v834, %v832
    %v1253 = vpack.c.b16 %v835, %v833
    %v1254 = vpack.c.b16 %v838, %v836
    %v1255 = vpack.c.b16 %v839, %v837
    %v1256 = vpack.c.b16 %v842, %v840
    %v1257 = vpack.c.b16 %v843, %v841
    %v1258 = vpack.c.b16 %v846, %v844
    %v1259 = vpack.c.b16 %v847, %v845
    %v1260 = vpack.c.b16 %v850, %v848
    %v1261 = vpack.c.b16 %v851, %v849
    %v1262 = vpack.c.b16 %v854, %v852
    %v1263 = vpack.c.b16 %v855, %v853
    %v1264 = vpack.c.b16 %v858, %v856
    %v1265 = vpack.c.b16 %v859, %v857
    %v1266 = vpack.c.b16 %v862, %v860
    %v1267 = vpack.c.b16 %v863, %v861
    %v1268 = vpack.c.b16 %v866, %v864
    %v1269 = vpack.c.b16 %v867, %v865
    %v1270 = vpack.c.b16 %v870, %v868
    %v1271 = vpack.c.b16 %v871, %v869
    %v1272 = vpack.c.b16 %v874, %v872
    %v1273 = vpack.c.b16 %v875, %v873
    %v1274 = vpack.c.b16 %v878, %v876
    %v1275 = vpack.c.b16 %v879, %v877
    %v1276 = vpack.c.b16 %v882, %v880
    %v1277 = vpack.c.b16 %v883, %v881
    %v1278 = vpack.c.b16 %v886, %v884
    %v1279 = vpack.c.b16 %v887, %v885
    %v1280 = vpack.c.b16 %v890, %v888
    %v1281 = vpack.c.b16 %v891, %v889
    %v1282 = vpack.c.b16 %v894, %v892
    %v1283 = vpack.c.b16 %v895, %v893
    %v1284 = vpack.c.b16 %v898, %v896
    %v1285 = vpack.c.b16 %v899, %v897
    %v1286 = vpack.c.b16 %v902, %v900
    %v1287 = vpack.c.b16 %v903, %v901
    %v1288 = vpack.c.b16 %v906, %v904
    %v1289 = vpack.c.b16 %v907, %v905
    %v1290 = vpack.c.b16 %v910, %v908
    %v1291 = vpack.c.b16 %v911, %v909
    %v1292 = vpack.c.b16 %v914, %v912
    %v1293 = vpack.c.b16 %v915, %v913
    %v1294 = vpack.c.b16 %v918, %v916
    %v1295 = vpack.c.b16 %v919, %v917
    %v1296 = vpack.c.b16 %v922, %v920
    %v1297 = vpack.c.b16 %v923, %v921
    %v1298 = vpack.c.b16 %v926, %v924
    %v1299 = vpack.c.b16 %v927, %v925
    %v1300 = vpack.c.b16 %v930, %v928
    %v1301 = vpack.c.b16 %v931, %v929
    %v1302 = vpack.c.b16 %v934, %v932
    %v1303 = vpack.c.b16 %v935, %v933
    %v1304 = vpack.c.b16 %v938, %v936
    %v1305 = vpack.c.b16 %v939, %v937
    %v1306 = vpack.c.b16 %v942, %v940
    %v1307 = vpack.c.b16 %v943, %v941
    %v1308 = vpack.c.b16 %v946, %v944
    %v1309 = vpack.c.b16 %v947, %v945
    %v1310 = vpack.c.b16 %v950, %v948
    %v1311 = vpack.c.b16 %v951, %v949
    %v1312 = vpack.c.b16 %v954, %v952
    %v1313 = vpack.c.b16 %v955, %v953
    %v1314 = vpack.c.b16 %v958, %v956
    %v1315 = vpack.c.b16 %v959, %v957
    %v1316 = vpack.c.b16 %v962, %v960
    %v1317 = vpack.c.b16 %v963, %v961
    %v1318 = vpack.c.b16 %v966, %v964
    %v1319 = vpack.c.b16 %v967, %v965
    %v1320 = vpack.c.b16 %v970, %v968
    %v1321 = vpack.c.b16 %v971, %v969
    %v1322 = vpack.c.b16 %v974, %v972
    %v1323 = vpack.c.b16 %v975, %v973
    %v1324 = vpack.c.b16 %v978, %v976
    %v1325 = vpack.c.b16 %v979, %v977
    %v1326 = vpack.c.b16 %v982, %v980
    %v1327 = vpack.c.b16 %v983, %v981
    %v1328 = vpack.c.b16 %v986, %v984
    %v1329 = vpack.c.b16 %v987, %v985
    %v1330 = vpack.c.b16 %v990, %v988
    %v1331 = vpack.c.b16 %v991, %v989
    %v1332 = vpack.c.b16 %v994, %v992
    %v1333 = vpack.c.b16 %v995, %v993
    %v1334 = vpack.c.b16 %v998, %v996
    %v1335 = vpack.c.b16 %v999, %v997
    %v1336 = vpack.c.b16 %v1002, %v1000
    %v1337 = vpack.c.b16 %v1003, %v1001
    %v1338 = vpack.c.b16 %v1006, %v1004
    %v1339 = vpack.c.b16 %v1007, %v1005
    %v1340 = vpack.c.b16 %v1010, %v1008
    %v1341 = vpack.c.b16 %v1011, %v1009
    %v1342 = vpack.c.b16 %v1014, %v1012
    %v1343 = vpack.c.b16 %v1015, %v1013
    %v1344 = vpack.c.b16 %v1018, %v1016
    %v1345 = vpack.c.b16 %v1019, %v1017
    %v1346 = vpack.c.b16 %v1022, %v1020
    %v1347 = vpack.c.b16 %v1023, %v1021
    %v1348 = vpack.c.b16 %v1026, %v1024
    %v1349 = vpack.c.b16 %v1027, %v1025
    %v1350 = vpack.c.b16 %v1030, %v1028
    %v1351 = vpack.c.b16 %v1031, %v1029
    %v1352 = vpack.c.b16 %v1034, %v1032
    %v1353 = vpack.c.b16 %v1035, %v1033
    %v1354 = vpack.c.b16 %v1038, %v1036
    %v1355 = vpack.c.b16 %v1039, %v1037
    %v1356 = vpack.c.b16 %v1042, %v1040
    %v1357 = vpack.c.b16 %v1043, %v1041
    %v1358 = vpack.c.b16 %v1046, %v1044
    %v1359 = vpack.c.b16 %v1047, %v1045
    %v1360 = vpack.c.b16 %v1050, %v1048
    %v1361 = vpack.c.b16 %v1051, %v1049
    %v1362 = vpack.c.b16 %v1054, %v1052
    %v1363 = vpack.c.b16 %v1055, %v1053
    %v1364 = vpack.c.b16 %v1058, %v1056
    %v1365 = vpack.c.b16 %v1059, %v1057
    %v1366 = vpack.c.b16 %v1062, %v1060
    %v1367 = vpack.c.b16 %v1063, %v1061
    %v1368 = vpack.c.b16 %v1066, %v1064
    %v1369 = vpack.c.b16 %v1067, %v1065
    %v1370 = vpack.c.b16 %v1070, %v1068
    %v1371 = vpack.c.b16 %v1071, %v1069
    %v1372 = vpack.c.b16 %v1074, %v1072
    %v1373 = vpack.c.b16 %v1075, %v1073
    %v1374 = vpack.c.b16 %v1078, %v1076
    %v1375 = vpack.c.b16 %v1079, %v1077
    %v1376 = vpack.c.b16 %v1082, %v1080
    %v1377 = vpack.c.b16 %v1083, %v1081
    %v1378 = vpack.c.b16 %v1086, %v1084
    %v1379 = vpack.c.b16 %v1087, %v1085
    %v1380 = vpack.c.b16 %v1090, %v1088
    %v1381 = vpack.c.b16 %v1091, %v1089
    %v1382 = vpack.c.b16 %v1094, %v1092
    %v1383 = vpack.c.b16 %v1095, %v1093
    %v1384 = vpack.c.b16 %v1098, %v1096
    %v1385 = vpack.c.b16 %v1099, %v1097
    %v1386 = vpack.c.b16 %v1102, %v1100
    %v1387 = vpack.c.b16 %v1103, %v1101
    %v1388 = vpack.c.b16 %v1106, %v1104
    %v1389 = vpack.c.b16 %v1107, %v1105
    %v1390 = vpack.c.b16 %v1110, %v1108
    %v1391 = vpack.c.b16 %v1111, %v1109
    %v1392 = vpack.c.b16 %v1114, %v1112
    %v1393 = vpack.c.b16 %v1115, %v1113
    %v1394 = vpack.c.b16 %v1118, %v1116
    %v1395 = vpack.c.b16 %v1119, %v1117
    %v1396 = vpack.c.b16 %v1122, %v1120
    %v1397 = vpack.c.b16 %v1123, %v1121
    %v1398 = vpack.c.b16 %v1126, %v1124
    %v1399 = vpack.c.b16 %v1127, %v1125
    %v1400 = vpack.c.b16 %v1130, %v1128
    %v1401 = vpack.c.b16 %v1131, %v1129
    %v1402 = vpack.c.b16 %v1134, %v1132
    %v1403 = vpack.c.b16 %v1135, %v1133
    %v1404 = vpack.c.b16 %v1138, %v1136
    %v1405 = vpack.c.b16 %v1139, %v1137
    %v1406 = vpack.c.b16 %v1142, %v1140
    %v1407 = vpack.c.b16 %v1143, %v1141
    %v1408 = vpack.c.b16 %v1146, %v1144
    %v1409 = vpack.c.b16 %v1147, %v1145
    %v1410 = vpack.c.b16 %v1150, %v1148
    %v1411 = vpack.c.b16 %v1151, %v1149
    %v1412 = vpack.c.b16 %v1154, %v1152
    %v1413 = vpack.c.b16 %v1155, %v1153
    %v1414 = vpack.c.b16 %v1158, %v1156
    %v1415 = vpack.c.b16 %v1159, %v1157
    %1672 = vmatprep.subr.bf16.mxu0 %v1161
    %1673 = vmatpush1.bf16.msra.mxu0 %v1160
    %1674 = vmatprep.subr.bf16.mxu0 %v1163
    %1675 = vmatpush1.bf16.msra.mxu0 %v1162
    %1676 = vmatprep.subr.bf16.mxu0 %v1165
    %1677 = vmatpush1.bf16.msra.mxu0 %v1164
    %1678 = vmatprep.subr.bf16.mxu0 %v1167
    %1679 = vmatpush1.bf16.msra.mxu0 %v1166
    %1680 = vmatprep.subr.bf16.mxu0 %v1169
    %1681 = vmatpush1.bf16.msra.mxu0 %v1168
    %1682 = vmatprep.subr.bf16.mxu0 %v1171
    %1683 = vmatpush1.bf16.msra.mxu0 %v1170
    %1684 = vmatprep.subr.bf16.mxu0 %v1173
    %1685 = vmatpush1.bf16.msra.mxu0 %v1172
    %1686 = vmatprep.subr.bf16.mxu0 %v1175
    %1687 = vmatpush1.bf16.msra.mxu0 %v1174
    %1688 = vmatprep.subr.bf16.mxu0 %v1177
    %1689 = vmatpush1.bf16.msra.mxu0 %v1176
    %1690 = vmatprep.subr.bf16.mxu0 %v1179
    %1691 = vmatpush1.bf16.msra.mxu0 %v1178
    %1692 = vmatprep.subr.bf16.mxu0 %v1181
    %1693 = vmatpush1.bf16.msra.mxu0 %v1180
    %1694 = vmatprep.subr.bf16.mxu0 %v1183
    %1695 = vmatpush1.bf16.msra.mxu0 %v1182
    %1696 = vmatprep.subr.bf16.mxu0 %v1185
    %1697 = vmatpush1.bf16.msra.mxu0 %v1184
    %1698 = vmatprep.subr.bf16.mxu0 %v1187
    %1699 = vmatpush1.bf16.msra.mxu0 %v1186
    %1700 = vmatprep.subr.bf16.mxu0 %v1189
    %1701 = vmatpush1.bf16.msra.mxu0 %v1188
    %1702 = vmatprep.subr.bf16.mxu0 %v1191
    %1703 = vmatpush1.bf16.msra.mxu0 %v1190
    %1704 = vmatprep.mubr.bf16.mxu0 %v361
    %1705 = vmatmul.mubr.bf16.gmra.mrb[0].mxu0 %v360
    %v1706 = vpop.f32.mrb[0].mxu0
    %v1707 = vadd.f32 %v329, %v1706
    %v1708 = vpop.f32.mrb[0].mxu0
    %v1709 = vadd.f32 %v333, %v1708
    %v1710 = vpop.f32.mrb[0].mxu0
    %v1711 = vpop.f32.mrb[0].mxu0
    %1712 = vdwg.mxu0
    %1713 = vmatprep.subr.bf16.mxu0 %v1193
    %1714 = vmatpush1.bf16.msra.mxu0 %v1192
    %1715 = vmatprep.subr.bf16.mxu0 %v1195
    %1716 = vmatpush1.bf16.msra.mxu0 %v1194
    %1717 = vmatprep.subr.bf16.mxu0 %v1197
    %1718 = vmatpush1.bf16.msra.mxu0 %v1196
    %1719 = vmatprep.subr.bf16.mxu0 %v1199
    %1720 = vmatpush1.bf16.msra.mxu0 %v1198
    %1721 = vmatprep.subr.bf16.mxu0 %v1201
    %1722 = vmatpush1.bf16.msra.mxu0 %v1200
    %1723 = vmatprep.subr.bf16.mxu0 %v1203
    %1724 = vmatpush1.bf16.msra.mxu0 %v1202
    %1725 = vmatprep.subr.bf16.mxu0 %v1205
    %1726 = vmatpush1.bf16.msra.mxu0 %v1204
    %1727 = vmatprep.subr.bf16.mxu0 %v1207
    %1728 = vmatpush1.bf16.msra.mxu0 %v1206
    %1729 = vmatprep.subr.bf16.mxu0 %v1209
    %1730 = vmatpush1.bf16.msra.mxu0 %v1208
    %1731 = vmatprep.subr.bf16.mxu0 %v1211
    %1732 = vmatpush1.bf16.msra.mxu0 %v1210
    %1733 = vmatprep.subr.bf16.mxu0 %v1213
    %1734 = vmatpush1.bf16.msra.mxu0 %v1212
    %1735 = vmatprep.subr.bf16.mxu0 %v1215
    %1736 = vmatpush1.bf16.msra.mxu0 %v1214
    %1737 = vmatprep.subr.bf16.mxu0 %v1217
    %1738 = vmatpush1.bf16.msra.mxu0 %v1216
    %1739 = vmatprep.subr.bf16.mxu0 %v1219
    %1740 = vmatpush1.bf16.msra.mxu0 %v1218
    %1741 = vmatprep.subr.bf16.mxu0 %v1221
    %1742 = vmatpush1.bf16.msra.mxu0 %v1220
    %1743 = vmatprep.subr.bf16.mxu0 %v1223
    %1744 = vmatpush1.bf16.msra.mxu0 %v1222
    %1745 = vmatprep.mubr.bf16.mxu0 %v363
    %1746 = vmatmul.mubr.bf16.gmra.mrb[0].mxu0 %v362
    %v1747 = vpop.f32.mrb[0].mxu0
    %v1748 = vadd.f32 %v1707, %v1747
    %v1749 = vpop.f32.mrb[0].mxu0
    %v1750 = vadd.f32 %v1709, %v1749
    %v1751 = vpop.f32.mrb[0].mxu0
    %v1752 = vpop.f32.mrb[0].mxu0
    %1753 = vdwg.mxu0
    %1754 = vmatprep.subr.bf16.mxu0 %v1225
    %1755 = vmatpush1.bf16.msra.mxu0 %v1224
    %1756 = vmatprep.subr.bf16.mxu0 %v1227
    %1757 = vmatpush1.bf16.msra.mxu0 %v1226
    %1758 = vmatprep.subr.bf16.mxu0 %v1229
    %1759 = vmatpush1.bf16.msra.mxu0 %v1228
    %1760 = vmatprep.subr.bf16.mxu0 %v1231
    %1761 = vmatpush1.bf16.msra.mxu0 %v1230
    %1762 = vmatprep.subr.bf16.mxu0 %v1233
    %1763 = vmatpush1.bf16.msra.mxu0 %v1232
    %1764 = vmatprep.subr.bf16.mxu0 %v1235
    %1765 = vmatpush1.bf16.msra.mxu0 %v1234
    %1766 = vmatprep.subr.bf16.mxu0 %v1237
    %1767 = vmatpush1.bf16.msra.mxu0 %v1236
    %1768 = vmatprep.subr.bf16.mxu0 %v1239
    %1769 = vmatpush1.bf16.msra.mxu0 %v1238
    %1770 = vmatprep.subr.bf16.mxu0 %v1241
    %1771 = vmatpush1.bf16.msra.mxu0 %v1240
    %1772 = vmatprep.subr.bf16.mxu0 %v1243
    %1773 = vmatpush1.bf16.msra.mxu0 %v1242
    %1774 = vmatprep.subr.bf16.mxu0 %v1245
    %1775 = vmatpush1.bf16.msra.mxu0 %v1244
    %1776 = vmatprep.subr.bf16.mxu0 %v1247
    %1777 = vmatpush1.bf16.msra.mxu0 %v1246
    %1778 = vmatprep.subr.bf16.mxu0 %v1249
    %1779 = vmatpush1.bf16.msra.mxu0 %v1248
    %1780 = vmatprep.subr.bf16.mxu0 %v1251
    %1781 = vmatpush1.bf16.msra.mxu0 %v1250
    %1782 = vmatprep.subr.bf16.mxu0 %v1253
    %1783 = vmatpush1.bf16.msra.mxu0 %v1252
    %1784 = vmatprep.subr.bf16.mxu0 %v1255
    %1785 = vmatpush1.bf16.msra.mxu0 %v1254
    %1786 = vmatprep.mubr.bf16.mxu0 %v365
    %1787 = vmatmul.mubr.bf16.gmra.mrb[0].mxu0 %v364
    %v1788 = vpop.f32.mrb[0].mxu0
    %v1789 = vadd.f32 %v1748, %v1788
    %v1790 = vpop.f32.mrb[0].mxu0
    %v1791 = vadd.f32 %v1750, %v1790
    %v1792 = vpop.f32.mrb[0].mxu0
    %v1793 = vpop.f32.mrb[0].mxu0
    %1794 = vdwg.mxu0
    %1795 = vmatprep.subr.bf16.mxu0 %v1257
    %1796 = vmatpush1.bf16.msra.mxu0 %v1256
    %1797 = vmatprep.subr.bf16.mxu0 %v1259
    %1798 = vmatpush1.bf16.msra.mxu0 %v1258
    %1799 = vmatprep.subr.bf16.mxu0 %v1261
    %1800 = vmatpush1.bf16.msra.mxu0 %v1260
    %1801 = vmatprep.subr.bf16.mxu0 %v1263
    %1802 = vmatpush1.bf16.msra.mxu0 %v1262
    %1803 = vmatprep.subr.bf16.mxu0 %v1265
    %1804 = vmatpush1.bf16.msra.mxu0 %v1264
    %1805 = vmatprep.subr.bf16.mxu0 %v1267
    %1806 = vmatpush1.bf16.msra.mxu0 %v1266
    %1807 = vmatprep.subr.bf16.mxu0 %v1269
    %1808 = vmatpush1.bf16.msra.mxu0 %v1268
    %1809 = vmatprep.subr.bf16.mxu0 %v1271
    %1810 = vmatpush1.bf16.msra.mxu0 %v1270
    %1811 = vmatprep.subr.bf16.mxu0 %v1273
    %1812 = vmatpush1.bf16.msra.mxu0 %v1272
    %1813 = vmatprep.subr.bf16.mxu0 %v1275
    %1814 = vmatpush1.bf16.msra.mxu0 %v1274
    %1815 = vmatprep.subr.bf16.mxu0 %v1277
    %1816 = vmatpush1.bf16.msra.mxu0 %v1276
    %1817 = vmatprep.subr.bf16.mxu0 %v1279
    %1818 = vmatpush1.bf16.msra.mxu0 %v1278
    %1819 = vmatprep.subr.bf16.mxu0 %v1281
    %1820 = vmatpush1.bf16.msra.mxu0 %v1280
    %1821 = vmatprep.subr.bf16.mxu0 %v1283
    %1822 = vmatpush1.bf16.msra.mxu0 %v1282
    %1823 = vmatprep.subr.bf16.mxu0 %v1285
    %1824 = vmatpush1.bf16.msra.mxu0 %v1284
    %1825 = vmatprep.subr.bf16.mxu0 %v1287
    %1826 = vmatpush1.bf16.msra.mxu0 %v1286
    %1827 = vmatprep.mubr.bf16.mxu0 %v367
    %1828 = vmatmul.mubr.bf16.gmra.mrb[0].mxu0 %v366
    %v1829 = vpop.f32.mrb[0].mxu0
    %v1830 = vadd.f32 %v1789, %v1829
    %v1831 = vpop.f32.mrb[0].mxu0
    %v1832 = vadd.f32 %v1791, %v1831
    %v1833 = vpop.f32.mrb[0].mxu0
    %v1834 = vpop.f32.mrb[0].mxu0
    %1835 = vdwg.mxu0
    %1836 = vmatprep.subr.bf16.mxu0 %v1289
    %1837 = vmatpush1.bf16.msra.mxu0 %v1288
    %1838 = vmatprep.subr.bf16.mxu0 %v1291
    %1839 = vmatpush1.bf16.msra.mxu0 %v1290
    %1840 = vmatprep.subr.bf16.mxu0 %v1293
    %1841 = vmatpush1.bf16.msra.mxu0 %v1292
    %1842 = vmatprep.subr.bf16.mxu0 %v1295
    %1843 = vmatpush1.bf16.msra.mxu0 %v1294
    %1844 = vmatprep.subr.bf16.mxu0 %v1297
    %1845 = vmatpush1.bf16.msra.mxu0 %v1296
    %1846 = vmatprep.subr.bf16.mxu0 %v1299
    %1847 = vmatpush1.bf16.msra.mxu0 %v1298
    %1848 = vmatprep.subr.bf16.mxu0 %v1301
    %1849 = vmatpush1.bf16.msra.mxu0 %v1300
    %1850 = vmatprep.subr.bf16.mxu0 %v1303
    %1851 = vmatpush1.bf16.msra.mxu0 %v1302
    %1852 = vmatprep.subr.bf16.mxu0 %v1305
    %1853 = vmatpush1.bf16.msra.mxu0 %v1304
    %1854 = vmatprep.subr.bf16.mxu0 %v1307
    %1855 = vmatpush1.bf16.msra.mxu0 %v1306
    %1856 = vmatprep.subr.bf16.mxu0 %v1309
    %1857 = vmatpush1.bf16.msra.mxu0 %v1308
    %1858 = vmatprep.subr.bf16.mxu0 %v1311
    %1859 = vmatpush1.bf16.msra.mxu0 %v1310
    %1860 = vmatprep.subr.bf16.mxu0 %v1313
    %1861 = vmatpush1.bf16.msra.mxu0 %v1312
    %1862 = vmatprep.subr.bf16.mxu0 %v1315
    %1863 = vmatpush1.bf16.msra.mxu0 %v1314
    %1864 = vmatprep.subr.bf16.mxu0 %v1317
    %1865 = vmatpush1.bf16.msra.mxu0 %v1316
    %1866 = vmatprep.subr.bf16.mxu0 %v1319
    %1867 = vmatpush1.bf16.msra.mxu0 %v1318
    %1868 = vmatprep.mubr.bf16.mxu0 %v369
    %1869 = vmatmul.mubr.bf16.gmra.mrb[0].mxu0 %v368
    %v1870 = vpop.f32.mrb[0].mxu0
    %v1871 = vadd.f32 %v1830, %v1870
    %v1872 = vpop.f32.mrb[0].mxu0
    %v1873 = vadd.f32 %v1832, %v1872
    %v1874 = vpop.f32.mrb[0].mxu0
    %v1875 = vpop.f32.mrb[0].mxu0
    %1876 = vdwg.mxu0
    %1877 = vmatprep.subr.bf16.mxu0 %v1321
    %1878 = vmatpush1.bf16.msra.mxu0 %v1320
    %1879 = vmatprep.subr.bf16.mxu0 %v1323
    %1880 = vmatpush1.bf16.msra.mxu0 %v1322
    %1881 = vmatprep.subr.bf16.mxu0 %v1325
    %1882 = vmatpush1.bf16.msra.mxu0 %v1324
    %1883 = vmatprep.subr.bf16.mxu0 %v1327
    %1884 = vmatpush1.bf16.msra.mxu0 %v1326
    %1885 = vmatprep.subr.bf16.mxu0 %v1329
    %1886 = vmatpush1.bf16.msra.mxu0 %v1328
    %1887 = vmatprep.subr.bf16.mxu0 %v1331
    %1888 = vmatpush1.bf16.msra.mxu0 %v1330
    %1889 = vmatprep.subr.bf16.mxu0 %v1333
    %1890 = vmatpush1.bf16.msra.mxu0 %v1332
    %1891 = vmatprep.subr.bf16.mxu0 %v1335
    %1892 = vmatpush1.bf16.msra.mxu0 %v1334
    %1893 = vmatprep.subr.bf16.mxu0 %v1337
    %1894 = vmatpush1.bf16.msra.mxu0 %v1336
    %1895 = vmatprep.subr.bf16.mxu0 %v1339
    %1896 = vmatpush1.bf16.msra.mxu0 %v1338
    %1897 = vmatprep.subr.bf16.mxu0 %v1341
    %1898 = vmatpush1.bf16.msra.mxu0 %v1340
    %1899 = vmatprep.subr.bf16.mxu0 %v1343
    %1900 = vmatpush1.bf16.msra.mxu0 %v1342
    %1901 = vmatprep.subr.bf16.mxu0 %v1345
    %1902 = vmatpush1.bf16.msra.mxu0 %v1344
    %1903 = vmatprep.subr.bf16.mxu0 %v1347
    %1904 = vmatpush1.bf16.msra.mxu0 %v1346
    %1905 = vmatprep.subr.bf16.mxu0 %v1349
    %1906 = vmatpush1.bf16.msra.mxu0 %v1348
    %1907 = vmatprep.subr.bf16.mxu0 %v1351
    %1908 = vmatpush1.bf16.msra.mxu0 %v1350
    %1909 = vmatprep.mubr.bf16.mxu0 %v371
    %1910 = vmatmul.mubr.bf16.gmra.mrb[0].mxu0 %v370
    %v1911 = vpop.f32.mrb[0].mxu0
    %v1912 = vadd.f32 %v1871, %v1911
    %v1913 = vpop.f32.mrb[0].mxu0
    %v1914 = vadd.f32 %v1873, %v1913
    %v1915 = vpop.f32.mrb[0].mxu0
    %v1916 = vpop.f32.mrb[0].mxu0
    %1917 = vdwg.mxu0
    %1918 = vmatprep.subr.bf16.mxu0 %v1353
    %1919 = vmatpush1.bf16.msra.mxu0 %v1352
    %1920 = vmatprep.subr.bf16.mxu0 %v1355
    %1921 = vmatpush1.bf16.msra.mxu0 %v1354
    %1922 = vmatprep.subr.bf16.mxu0 %v1357
    %1923 = vmatpush1.bf16.msra.mxu0 %v1356
    %1924 = vmatprep.subr.bf16.mxu0 %v1359
    %1925 = vmatpush1.bf16.msra.mxu0 %v1358
    %1926 = vmatprep.subr.bf16.mxu0 %v1361
    %1927 = vmatpush1.bf16.msra.mxu0 %v1360
    %1928 = vmatprep.subr.bf16.mxu0 %v1363
    %1929 = vmatpush1.bf16.msra.mxu0 %v1362
    %1930 = vmatprep.subr.bf16.mxu0 %v1365
    %1931 = vmatpush1.bf16.msra.mxu0 %v1364
    %1932 = vmatprep.subr.bf16.mxu0 %v1367
    %1933 = vmatpush1.bf16.msra.mxu0 %v1366
    %1934 = vmatprep.subr.bf16.mxu0 %v1369
    %1935 = vmatpush1.bf16.msra.mxu0 %v1368
    %1936 = vmatprep.subr.bf16.mxu0 %v1371
    %1937 = vmatpush1.bf16.msra.mxu0 %v1370
    %1938 = vmatprep.subr.bf16.mxu0 %v1373
    %1939 = vmatpush1.bf16.msra.mxu0 %v1372
    %1940 = vmatprep.subr.bf16.mxu0 %v1375
    %1941 = vmatpush1.bf16.msra.mxu0 %v1374
    %1942 = vmatprep.subr.bf16.mxu0 %v1377
    %1943 = vmatpush1.bf16.msra.mxu0 %v1376
    %1944 = vmatprep.subr.bf16.mxu0 %v1379
    %1945 = vmatpush1.bf16.msra.mxu0 %v1378
    %1946 = vmatprep.subr.bf16.mxu0 %v1381
    %1947 = vmatpush1.bf16.msra.mxu0 %v1380
    %1948 = vmatprep.subr.bf16.mxu0 %v1383
    %1949 = vmatpush1.bf16.msra.mxu0 %v1382
    %1950 = vmatprep.mubr.bf16.mxu0 %v373
    %1951 = vmatmul.mubr.bf16.gmra.mrb[0].mxu0 %v372
    %v1952 = vpop.f32.mrb[0].mxu0
    %v1953 = vadd.f32 %v1912, %v1952
    %v1954 = vpop.f32.mrb[0].mxu0
    %v1955 = vadd.f32 %v1914, %v1954
    %v1956 = vpop.f32.mrb[0].mxu0
    %v1957 = vpop.f32.mrb[0].mxu0
    %1958 = vdwg.mxu0
    %1959 = vmatprep.subr.bf16.mxu0 %v1385
    %1960 = vmatpush1.bf16.msra.mxu0 %v1384
    %1961 = vmatprep.subr.bf16.mxu0 %v1387
    %1962 = vmatpush1.bf16.msra.mxu0 %v1386
    %1963 = vmatprep.subr.bf16.mxu0 %v1389
    %1964 = vmatpush1.bf16.msra.mxu0 %v1388
    %1965 = vmatprep.subr.bf16.mxu0 %v1391
    %1966 = vmatpush1.bf16.msra.mxu0 %v1390
    %1967 = vmatprep.subr.bf16.mxu0 %v1393
    %1968 = vmatpush1.bf16.msra.mxu0 %v1392
    %1969 = vmatprep.subr.bf16.mxu0 %v1395
    %1970 = vmatpush1.bf16.msra.mxu0 %v1394
    %1971 = vmatprep.subr.bf16.mxu0 %v1397
    %1972 = vmatpush1.bf16.msra.mxu0 %v1396
    %1973 = vmatprep.subr.bf16.mxu0 %v1399
    %1974 = vmatpush1.bf16.msra.mxu0 %v1398
    %1975 = vmatprep.subr.bf16.mxu0 %v1401
    %1976 = vmatpush1.bf16.msra.mxu0 %v1400
    %1977 = vmatprep.subr.bf16.mxu0 %v1403
    %1978 = vmatpush1.bf16.msra.mxu0 %v1402
    %1979 = vmatprep.subr.bf16.mxu0 %v1405
    %1980 = vmatpush1.bf16.msra.mxu0 %v1404
    %1981 = vmatprep.subr.bf16.mxu0 %v1407
    %1982 = vmatpush1.bf16.msra.mxu0 %v1406
    %1983 = vmatprep.subr.bf16.mxu0 %v1409
    %1984 = vmatpush1.bf16.msra.mxu0 %v1408
    %1985 = vmatprep.subr.bf16.mxu0 %v1411
    %1986 = vmatpush1.bf16.msra.mxu0 %v1410
    %1987 = vmatprep.subr.bf16.mxu0 %v1413
    %1988 = vmatpush1.bf16.msra.mxu0 %v1412
    %1989 = vmatprep.subr.bf16.mxu0 %v1415
    %1990 = vmatpush1.bf16.msra.mxu0 %v1414
    %1991 = vmatprep.mubr.bf16.mxu0 %v375
    %1992 = vmatmul.mubr.bf16.gmra.mrb[0].mxu0 %v374
    %v1993 = vpop.f32.mrb[0].mxu0
    %v1994 = vadd.f32 %v1953, %v1993
    %v1995 = vpop.f32.mrb[0].mxu0
    %v1996 = vadd.f32 %v1955, %v1995
    %v1997 = vpop.f32.mrb[0].mxu0
    %v1998 = vpop.f32.mrb[0].mxu0
    %1999 = vdwg.mxu0
    %v2000 = vmax.f32 %v1994, 0.0
    %v2001 = vmax.f32 %v1996, 0.0
    %v2002 = vpack.c.bf16 %v2000, %v2000
    %v2003 = vpack.c.bf16 %v2001, %v2001
    %v2004 = vld [vmem:[#allocation7] sm:$0xff]
    %v2005 = vld [vmem:[#allocation7 + $0x8] sm:$0xff]
    %v2006 = vld [vmem:[#allocation7 + $0x10] sm:$0xff]
    %v2007 = vld [vmem:[#allocation7 + $0x18] sm:$0xff]
    %v2008 = vld [vmem:[#allocation7 + $0x20] sm:$0xff]
    %v2009 = vld [vmem:[#allocation7 + $0x28] sm:$0xff]
    %v2010 = vld [vmem:[#allocation7 + $0x30] sm:$0xff]
    %v2011 = vld [vmem:[#allocation7 + $0x38] sm:$0xff]
    %v2012 = vld [vmem:[#allocation7 + $0x40] sm:$0xff]
    %v2013 = vld [vmem:[#allocation7 + $0x48] sm:$0xff]
    %v2014 = vld [vmem:[#allocation7 + $0x50] sm:$0xff]
    %v2015 = vld [vmem:[#allocation7 + $0x58] sm:$0xff]
    %v2016 = vld [vmem:[#allocation7 + $0x60] sm:$0xff]
    %v2017 = vld [vmem:[#allocation7 + $0x68] sm:$0xff]
    %v2018 = vld [vmem:[#allocation7 + $0x70] sm:$0xff]
    %v2019 = vld [vmem:[#allocation7 + $0x78] sm:$0xff]
    %v2020 = vld [vmem:[#allocation7 + $0x80] sm:$0xff]
    %v2021 = vld [vmem:[#allocation7 + $0x88] sm:$0xff]
    %v2022 = vld [vmem:[#allocation7 + $0x90] sm:$0xff]
    %v2023 = vld [vmem:[#allocation7 + $0x98] sm:$0xff]
    %v2024 = vld [vmem:[#allocation7 + $0xa0] sm:$0xff]
    %v2025 = vld [vmem:[#allocation7 + $0xa8] sm:$0xff]
    %v2026 = vld [vmem:[#allocation7 + $0xb0] sm:$0xff]
    %v2027 = vld [vmem:[#allocation7 + $0xb8] sm:$0xff]
    %v2028 = vld [vmem:[#allocation7 + $0xc0] sm:$0xff]
    %v2029 = vld [vmem:[#allocation7 + $0xc8] sm:$0xff]
    %v2030 = vld [vmem:[#allocation7 + $0xd0] sm:$0xff]
    %v2031 = vld [vmem:[#allocation7 + $0xd8] sm:$0xff]
    %v2032 = vld [vmem:[#allocation7 + $0xe0] sm:$0xff]
    %v2033 = vld [vmem:[#allocation7 + $0xe8] sm:$0xff]
    %v2034 = vld [vmem:[#allocation7 + $0xf0] sm:$0xff]
    %v2035 = vld [vmem:[#allocation7 + $0xf8] sm:$0xff]
    %v2036 = vld [vmem:[#allocation7 + $0x100] sm:$0xff]
    %v2037 = vld [vmem:[#allocation7 + $0x108] sm:$0xff]
    %v2038 = vld [vmem:[#allocation7 + $0x110] sm:$0xff]
    %v2039 = vld [vmem:[#allocation7 + $0x118] sm:$0xff]
    %v2040 = vld [vmem:[#allocation7 + $0x120] sm:$0xff]
    %v2041 = vld [vmem:[#allocation7 + $0x128] sm:$0xff]
    %v2042 = vld [vmem:[#allocation7 + $0x130] sm:$0xff]
    %v2043 = vld [vmem:[#allocation7 + $0x138] sm:$0xff]
    %v2044 = vld [vmem:[#allocation7 + $0x140] sm:$0xff]
    %v2045 = vld [vmem:[#allocation7 + $0x148] sm:$0xff]
    %v2046 = vld [vmem:[#allocation7 + $0x150] sm:$0xff]
    %v2047 = vld [vmem:[#allocation7 + $0x158] sm:$0xff]
    %v2048 = vld [vmem:[#allocation7 + $0x160] sm:$0xff]
    %v2049 = vld [vmem:[#allocation7 + $0x168] sm:$0xff]
    %v2050 = vld [vmem:[#allocation7 + $0x170] sm:$0xff]
    %v2051 = vld [vmem:[#allocation7 + $0x178] sm:$0xff]
    %v2052 = vld [vmem:[#allocation7 + $0x180] sm:$0xff]
    %v2053 = vld [vmem:[#allocation7 + $0x188] sm:$0xff]
    %v2054 = vld [vmem:[#allocation7 + $0x190] sm:$0xff]
    %v2055 = vld [vmem:[#allocation7 + $0x198] sm:$0xff]
    %v2056 = vld [vmem:[#allocation7 + $0x1a0] sm:$0xff]
    %v2057 = vld [vmem:[#allocation7 + $0x1a8] sm:$0xff]
    %v2058 = vld [vmem:[#allocation7 + $0x1b0] sm:$0xff]
    %v2059 = vld [vmem:[#allocation7 + $0x1b8] sm:$0xff]
    %v2060 = vld [vmem:[#allocation7 + $0x1c0] sm:$0xff]
    %v2061 = vld [vmem:[#allocation7 + $0x1c8] sm:$0xff]
    %v2062 = vld [vmem:[#allocation7 + $0x1d0] sm:$0xff]
    %v2063 = vld [vmem:[#allocation7 + $0x1d8] sm:$0xff]
    %v2064 = vld [vmem:[#allocation7 + $0x1e0] sm:$0xff]
    %v2065 = vld [vmem:[#allocation7 + $0x1e8] sm:$0xff]
    %v2066 = vld [vmem:[#allocation7 + $0x1f0] sm:$0xff]
    %v2067 = vld [vmem:[#allocation7 + $0x1f8] sm:$0xff]
    %v2068 = vld [vmem:[#allocation7 + $0x200] sm:$0xff]
    %v2069 = vld [vmem:[#allocation7 + $0x208] sm:$0xff]
    %v2070 = vld [vmem:[#allocation7 + $0x210] sm:$0xff]
    %v2071 = vld [vmem:[#allocation7 + $0x218] sm:$0xff]
    %v2072 = vld [vmem:[#allocation7 + $0x220] sm:$0xff]
    %v2073 = vld [vmem:[#allocation7 + $0x228] sm:$0xff]
    %v2074 = vld [vmem:[#allocation7 + $0x230] sm:$0xff]
    %v2075 = vld [vmem:[#allocation7 + $0x238] sm:$0xff]
    %v2076 = vld [vmem:[#allocation7 + $0x240] sm:$0xff]
    %v2077 = vld [vmem:[#allocation7 + $0x248] sm:$0xff]
    %v2078 = vld [vmem:[#allocation7 + $0x250] sm:$0xff]
    %v2079 = vld [vmem:[#allocation7 + $0x258] sm:$0xff]
    %v2080 = vld [vmem:[#allocation7 + $0x260] sm:$0xff]
    %v2081 = vld [vmem:[#allocation7 + $0x268] sm:$0xff]
    %v2082 = vld [vmem:[#allocation7 + $0x270] sm:$0xff]
    %v2083 = vld [vmem:[#allocation7 + $0x278] sm:$0xff]
    %v2084 = vld [vmem:[#allocation7 + $0x280] sm:$0xff]
    %v2085 = vld [vmem:[#allocation7 + $0x288] sm:$0xff]
    %v2086 = vld [vmem:[#allocation7 + $0x290] sm:$0xff]
    %v2087 = vld [vmem:[#allocation7 + $0x298] sm:$0xff]
    %v2088 = vld [vmem:[#allocation7 + $0x2a0] sm:$0xff]
    %v2089 = vld [vmem:[#allocation7 + $0x2a8] sm:$0xff]
    %v2090 = vld [vmem:[#allocation7 + $0x2b0] sm:$0xff]
    %v2091 = vld [vmem:[#allocation7 + $0x2b8] sm:$0xff]
    %v2092 = vld [vmem:[#allocation7 + $0x2c0] sm:$0xff]
    %v2093 = vld [vmem:[#allocation7 + $0x2c8] sm:$0xff]
    %v2094 = vld [vmem:[#allocation7 + $0x2d0] sm:$0xff]
    %v2095 = vld [vmem:[#allocation7 + $0x2d8] sm:$0xff]
    %v2096 = vld [vmem:[#allocation7 + $0x2e0] sm:$0xff]
    %v2097 = vld [vmem:[#allocation7 + $0x2e8] sm:$0xff]
    %v2098 = vld [vmem:[#allocation7 + $0x2f0] sm:$0xff]
    %v2099 = vld [vmem:[#allocation7 + $0x2f8] sm:$0xff]
    %v2100 = vld [vmem:[#allocation7 + $0x300] sm:$0xff]
    %v2101 = vld [vmem:[#allocation7 + $0x308] sm:$0xff]
    %v2102 = vld [vmem:[#allocation7 + $0x310] sm:$0xff]
    %v2103 = vld [vmem:[#allocation7 + $0x318] sm:$0xff]
    %v2104 = vld [vmem:[#allocation7 + $0x320] sm:$0xff]
    %v2105 = vld [vmem:[#allocation7 + $0x328] sm:$0xff]
    %v2106 = vld [vmem:[#allocation7 + $0x330] sm:$0xff]
    %v2107 = vld [vmem:[#allocation7 + $0x338] sm:$0xff]
    %v2108 = vld [vmem:[#allocation7 + $0x340] sm:$0xff]
    %v2109 = vld [vmem:[#allocation7 + $0x348] sm:$0xff]
    %v2110 = vld [vmem:[#allocation7 + $0x350] sm:$0xff]
    %v2111 = vld [vmem:[#allocation7 + $0x358] sm:$0xff]
    %v2112 = vld [vmem:[#allocation7 + $0x360] sm:$0xff]
    %v2113 = vld [vmem:[#allocation7 + $0x368] sm:$0xff]
    %v2114 = vld [vmem:[#allocation7 + $0x370] sm:$0xff]
    %v2115 = vld [vmem:[#allocation7 + $0x378] sm:$0xff]
    %v2116 = vld [vmem:[#allocation7 + $0x380] sm:$0xff]
    %v2117 = vld [vmem:[#allocation7 + $0x388] sm:$0xff]
    %v2118 = vld [vmem:[#allocation7 + $0x390] sm:$0xff]
    %v2119 = vld [vmem:[#allocation7 + $0x398] sm:$0xff]
    %v2120 = vld [vmem:[#allocation7 + $0x3a0] sm:$0xff]
    %v2121 = vld [vmem:[#allocation7 + $0x3a8] sm:$0xff]
    %v2122 = vld [vmem:[#allocation7 + $0x3b0] sm:$0xff]
    %v2123 = vld [vmem:[#allocation7 + $0x3b8] sm:$0xff]
    %v2124 = vld [vmem:[#allocation7 + $0x3c0] sm:$0xff]
    %v2125 = vld [vmem:[#allocation7 + $0x3c8] sm:$0xff]
    %v2126 = vld [vmem:[#allocation7 + $0x3d0] sm:$0xff]
    %v2127 = vld [vmem:[#allocation7 + $0x3d8] sm:$0xff]
    %v2128 = vld [vmem:[#allocation7 + $0x3e0] sm:$0xff]
    %v2129 = vld [vmem:[#allocation7 + $0x3e8] sm:$0xff]
    %v2130 = vld [vmem:[#allocation7 + $0x3f0] sm:$0xff]
    %v2131 = vld [vmem:[#allocation7 + $0x3f8] sm:$0xff]
    %v2132 = vld [vmem:[%s4] sm:$0xff]
    %v2134 = vlaneseq
    %v2135 = vshrl.u32 %v2134, 7
    %v2136 = vsub.s32 0, %v2135
    %v2137 = vrot.slane %v2132, %v2136
    %v2138 = vlaneseq
    %v2139 = vshrl.u32 %v2138, 7
    %v2140 = vsub.s32 1, %v2139
    %v2141 = vrot.slane %v2132, %v2140
    %v2142 = vlaneseq
    %v2143 = vshrl.u32 %v2142, 7
    %v2144 = vsub.s32 2, %v2143
    %v2145 = vrot.slane %v2132, %v2144
    %v2146 = vlaneseq
    %v2147 = vshrl.u32 %v2146, 7
    %v2148 = vsub.s32 3, %v2147
    %v2149 = vrot.slane %v2132, %v2148
    %v2150 = vlaneseq
    %v2151 = vshrl.u32 %v2150, 7
    %v2152 = vsub.s32 4, %v2151
    %v2153 = vrot.slane %v2132, %v2152
    %v2154 = vlaneseq
    %v2155 = vshrl.u32 %v2154, 7
    %v2156 = vsub.s32 5, %v2155
    %v2157 = vrot.slane %v2132, %v2156
    %v2158 = vlaneseq
    %v2159 = vshrl.u32 %v2158, 7
    %v2160 = vsub.s32 6, %v2159
    %v2161 = vrot.slane %v2132, %v2160
    %v2162 = vlaneseq
    %v2163 = vshrl.u32 %v2162, 7
    %v2164 = vsub.s32 7, %v2163
    %v2165 = vrot.slane %v2132, %v2164
    %v2302 = vunpack.c.l.b16 %v2004
    %v2303 = vunpack.c.h.b16 %v2004
    %v2304 = vunpack.c.l.b16 %v2005
    %v2305 = vunpack.c.h.b16 %v2005
    %v2306 = vunpack.c.l.b16 %v2006
    %v2307 = vunpack.c.h.b16 %v2006
    %v2308 = vunpack.c.l.b16 %v2007
    %v2309 = vunpack.c.h.b16 %v2007
    %v2310 = vunpack.c.l.b16 %v2008
    %v2311 = vunpack.c.h.b16 %v2008
    %v2312 = vunpack.c.l.b16 %v2009
    %v2313 = vunpack.c.h.b16 %v2009
    %v2314 = vunpack.c.l.b16 %v2010
    %v2315 = vunpack.c.h.b16 %v2010
    %v2316 = vunpack.c.l.b16 %v2011
    %v2317 = vunpack.c.h.b16 %v2011
    %v2318 = vunpack.c.l.b16 %v2012
    %v2319 = vunpack.c.h.b16 %v2012
    %v2320 = vunpack.c.l.b16 %v2013
    %v2321 = vunpack.c.h.b16 %v2013
    %v2322 = vunpack.c.l.b16 %v2014
    %v2323 = vunpack.c.h.b16 %v2014
    %v2324 = vunpack.c.l.b16 %v2015
    %v2325 = vunpack.c.h.b16 %v2015
    %v2326 = vunpack.c.l.b16 %v2016
    %v2327 = vunpack.c.h.b16 %v2016
    %v2328 = vunpack.c.l.b16 %v2017
    %v2329 = vunpack.c.h.b16 %v2017
    %v2330 = vunpack.c.l.b16 %v2018
    %v2331 = vunpack.c.h.b16 %v2018
    %v2332 = vunpack.c.l.b16 %v2019
    %v2333 = vunpack.c.h.b16 %v2019
    %v2334 = vunpack.c.l.b16 %v2020
    %v2335 = vunpack.c.h.b16 %v2020
    %v2336 = vunpack.c.l.b16 %v2021
    %v2337 = vunpack.c.h.b16 %v2021
    %v2338 = vunpack.c.l.b16 %v2022
    %v2339 = vunpack.c.h.b16 %v2022
    %v2340 = vunpack.c.l.b16 %v2023
    %v2341 = vunpack.c.h.b16 %v2023
    %v2342 = vunpack.c.l.b16 %v2024
    %v2343 = vunpack.c.h.b16 %v2024
    %v2344 = vunpack.c.l.b16 %v2025
    %v2345 = vunpack.c.h.b16 %v2025
    %v2346 = vunpack.c.l.b16 %v2026
    %v2347 = vunpack.c.h.b16 %v2026
    %v2348 = vunpack.c.l.b16 %v2027
    %v2349 = vunpack.c.h.b16 %v2027
    %v2350 = vunpack.c.l.b16 %v2028
    %v2351 = vunpack.c.h.b16 %v2028
    %v2352 = vunpack.c.l.b16 %v2029
    %v2353 = vunpack.c.h.b16 %v2029
    %v2354 = vunpack.c.l.b16 %v2030
    %v2355 = vunpack.c.h.b16 %v2030
    %v2356 = vunpack.c.l.b16 %v2031
    %v2357 = vunpack.c.h.b16 %v2031
    %v2358 = vunpack.c.l.b16 %v2032
    %v2359 = vunpack.c.h.b16 %v2032
    %v2360 = vunpack.c.l.b16 %v2033
    %v2361 = vunpack.c.h.b16 %v2033
    %v2362 = vunpack.c.l.b16 %v2034
    %v2363 = vunpack.c.h.b16 %v2034
    %v2364 = vunpack.c.l.b16 %v2035
    %v2365 = vunpack.c.h.b16 %v2035
    %v2366 = vunpack.c.l.b16 %v2036
    %v2367 = vunpack.c.h.b16 %v2036
    %v2368 = vunpack.c.l.b16 %v2037
    %v2369 = vunpack.c.h.b16 %v2037
    %v2370 = vunpack.c.l.b16 %v2038
    %v2371 = vunpack.c.h.b16 %v2038
    %v2372 = vunpack.c.l.b16 %v2039
    %v2373 = vunpack.c.h.b16 %v2039
    %v2374 = vunpack.c.l.b16 %v2040
    %v2375 = vunpack.c.h.b16 %v2040
    %v2376 = vunpack.c.l.b16 %v2041
    %v2377 = vunpack.c.h.b16 %v2041
    %v2378 = vunpack.c.l.b16 %v2042
    %v2379 = vunpack.c.h.b16 %v2042
    %v2380 = vunpack.c.l.b16 %v2043
    %v2381 = vunpack.c.h.b16 %v2043
    %v2382 = vunpack.c.l.b16 %v2044
    %v2383 = vunpack.c.h.b16 %v2044
    %v2384 = vunpack.c.l.b16 %v2045
    %v2385 = vunpack.c.h.b16 %v2045
    %v2386 = vunpack.c.l.b16 %v2046
    %v2387 = vunpack.c.h.b16 %v2046
    %v2388 = vunpack.c.l.b16 %v2047
    %v2389 = vunpack.c.h.b16 %v2047
    %v2390 = vunpack.c.l.b16 %v2048
    %v2391 = vunpack.c.h.b16 %v2048
    %v2392 = vunpack.c.l.b16 %v2049
    %v2393 = vunpack.c.h.b16 %v2049
    %v2394 = vunpack.c.l.b16 %v2050
    %v2395 = vunpack.c.h.b16 %v2050
    %v2396 = vunpack.c.l.b16 %v2051
    %v2397 = vunpack.c.h.b16 %v2051
    %v2398 = vunpack.c.l.b16 %v2052
    %v2399 = vunpack.c.h.b16 %v2052
    %v2400 = vunpack.c.l.b16 %v2053
    %v2401 = vunpack.c.h.b16 %v2053
    %v2402 = vunpack.c.l.b16 %v2054
    %v2403 = vunpack.c.h.b16 %v2054
    %v2404 = vunpack.c.l.b16 %v2055
    %v2405 = vunpack.c.h.b16 %v2055
    %v2406 = vunpack.c.l.b16 %v2056
    %v2407 = vunpack.c.h.b16 %v2056
    %v2408 = vunpack.c.l.b16 %v2057
    %v2409 = vunpack.c.h.b16 %v2057
    %v2410 = vunpack.c.l.b16 %v2058
    %v2411 = vunpack.c.h.b16 %v2058
    %v2412 = vunpack.c.l.b16 %v2059
    %v2413 = vunpack.c.h.b16 %v2059
    %v2414 = vunpack.c.l.b16 %v2060
    %v2415 = vunpack.c.h.b16 %v2060
    %v2416 = vunpack.c.l.b16 %v2061
    %v2417 = vunpack.c.h.b16 %v2061
    %v2418 = vunpack.c.l.b16 %v2062
    %v2419 = vunpack.c.h.b16 %v2062
    %v2420 = vunpack.c.l.b16 %v2063
    %v2421 = vunpack.c.h.b16 %v2063
    %v2422 = vunpack.c.l.b16 %v2064
    %v2423 = vunpack.c.h.b16 %v2064
    %v2424 = vunpack.c.l.b16 %v2065
    %v2425 = vunpack.c.h.b16 %v2065
    %v2426 = vunpack.c.l.b16 %v2066
    %v2427 = vunpack.c.h.b16 %v2066
    %v2428 = vunpack.c.l.b16 %v2067
    %v2429 = vunpack.c.h.b16 %v2067
    %v2430 = vunpack.c.l.b16 %v2068
    %v2431 = vunpack.c.h.b16 %v2068
    %v2432 = vunpack.c.l.b16 %v2069
    %v2433 = vunpack.c.h.b16 %v2069
    %v2434 = vunpack.c.l.b16 %v2070
    %v2435 = vunpack.c.h.b16 %v2070
    %v2436 = vunpack.c.l.b16 %v2071
    %v2437 = vunpack.c.h.b16 %v2071
    %v2438 = vunpack.c.l.b16 %v2072
    %v2439 = vunpack.c.h.b16 %v2072
    %v2440 = vunpack.c.l.b16 %v2073
    %v2441 = vunpack.c.h.b16 %v2073
    %v2442 = vunpack.c.l.b16 %v2074
    %v2443 = vunpack.c.h.b16 %v2074
    %v2444 = vunpack.c.l.b16 %v2075
    %v2445 = vunpack.c.h.b16 %v2075
    %v2446 = vunpack.c.l.b16 %v2076
    %v2447 = vunpack.c.h.b16 %v2076
    %v2448 = vunpack.c.l.b16 %v2077
    %v2449 = vunpack.c.h.b16 %v2077
    %v2450 = vunpack.c.l.b16 %v2078
    %v2451 = vunpack.c.h.b16 %v2078
    %v2452 = vunpack.c.l.b16 %v2079
    %v2453 = vunpack.c.h.b16 %v2079
    %v2454 = vunpack.c.l.b16 %v2080
    %v2455 = vunpack.c.h.b16 %v2080
    %v2456 = vunpack.c.l.b16 %v2081
    %v2457 = vunpack.c.h.b16 %v2081
    %v2458 = vunpack.c.l.b16 %v2082
    %v2459 = vunpack.c.h.b16 %v2082
    %v2460 = vunpack.c.l.b16 %v2083
    %v2461 = vunpack.c.h.b16 %v2083
    %v2462 = vunpack.c.l.b16 %v2084
    %v2463 = vunpack.c.h.b16 %v2084
    %v2464 = vunpack.c.l.b16 %v2085
    %v2465 = vunpack.c.h.b16 %v2085
    %v2466 = vunpack.c.l.b16 %v2086
    %v2467 = vunpack.c.h.b16 %v2086
    %v2468 = vunpack.c.l.b16 %v2087
    %v2469 = vunpack.c.h.b16 %v2087
    %v2470 = vunpack.c.l.b16 %v2088
    %v2471 = vunpack.c.h.b16 %v2088
    %v2472 = vunpack.c.l.b16 %v2089
    %v2473 = vunpack.c.h.b16 %v2089
    %v2474 = vunpack.c.l.b16 %v2090
    %v2475 = vunpack.c.h.b16 %v2090
    %v2476 = vunpack.c.l.b16 %v2091
    %v2477 = vunpack.c.h.b16 %v2091
    %v2478 = vunpack.c.l.b16 %v2092
    %v2479 = vunpack.c.h.b16 %v2092
    %v2480 = vunpack.c.l.b16 %v2093
    %v2481 = vunpack.c.h.b16 %v2093
    %v2482 = vunpack.c.l.b16 %v2094
    %v2483 = vunpack.c.h.b16 %v2094
    %v2484 = vunpack.c.l.b16 %v2095
    %v2485 = vunpack.c.h.b16 %v2095
    %v2486 = vunpack.c.l.b16 %v2096
    %v2487 = vunpack.c.h.b16 %v2096
    %v2488 = vunpack.c.l.b16 %v2097
    %v2489 = vunpack.c.h.b16 %v2097
    %v2490 = vunpack.c.l.b16 %v2098
    %v2491 = vunpack.c.h.b16 %v2098
    %v2492 = vunpack.c.l.b16 %v2099
    %v2493 = vunpack.c.h.b16 %v2099
    %v2494 = vunpack.c.l.b16 %v2100
    %v2495 = vunpack.c.h.b16 %v2100
    %v2496 = vunpack.c.l.b16 %v2101
    %v2497 = vunpack.c.h.b16 %v2101
    %v2498 = vunpack.c.l.b16 %v2102
    %v2499 = vunpack.c.h.b16 %v2102
    %v2500 = vunpack.c.l.b16 %v2103
    %v2501 = vunpack.c.h.b16 %v2103
    %v2502 = vunpack.c.l.b16 %v2104
    %v2503 = vunpack.c.h.b16 %v2104
    %v2504 = vunpack.c.l.b16 %v2105
    %v2505 = vunpack.c.h.b16 %v2105
    %v2506 = vunpack.c.l.b16 %v2106
    %v2507 = vunpack.c.h.b16 %v2106
    %v2508 = vunpack.c.l.b16 %v2107
    %v2509 = vunpack.c.h.b16 %v2107
    %v2510 = vunpack.c.l.b16 %v2108
    %v2511 = vunpack.c.h.b16 %v2108
    %v2512 = vunpack.c.l.b16 %v2109
    %v2513 = vunpack.c.h.b16 %v2109
    %v2514 = vunpack.c.l.b16 %v2110
    %v2515 = vunpack.c.h.b16 %v2110
    %v2516 = vunpack.c.l.b16 %v2111
    %v2517 = vunpack.c.h.b16 %v2111
    %v2518 = vunpack.c.l.b16 %v2112
    %v2519 = vunpack.c.h.b16 %v2112
    %v2520 = vunpack.c.l.b16 %v2113
    %v2521 = vunpack.c.h.b16 %v2113
    %v2522 = vunpack.c.l.b16 %v2114
    %v2523 = vunpack.c.h.b16 %v2114
    %v2524 = vunpack.c.l.b16 %v2115
    %v2525 = vunpack.c.h.b16 %v2115
    %v2526 = vunpack.c.l.b16 %v2116
    %v2527 = vunpack.c.h.b16 %v2116
    %v2528 = vunpack.c.l.b16 %v2117
    %v2529 = vunpack.c.h.b16 %v2117
    %v2530 = vunpack.c.l.b16 %v2118
    %v2531 = vunpack.c.h.b16 %v2118
    %v2532 = vunpack.c.l.b16 %v2119
    %v2533 = vunpack.c.h.b16 %v2119
    %v2534 = vunpack.c.l.b16 %v2120
    %v2535 = vunpack.c.h.b16 %v2120
    %v2536 = vunpack.c.l.b16 %v2121
    %v2537 = vunpack.c.h.b16 %v2121
    %v2538 = vunpack.c.l.b16 %v2122
    %v2539 = vunpack.c.h.b16 %v2122
    %v2540 = vunpack.c.l.b16 %v2123
    %v2541 = vunpack.c.h.b16 %v2123
    %v2542 = vunpack.c.l.b16 %v2124
    %v2543 = vunpack.c.h.b16 %v2124
    %v2544 = vunpack.c.l.b16 %v2125
    %v2545 = vunpack.c.h.b16 %v2125
    %v2546 = vunpack.c.l.b16 %v2126
    %v2547 = vunpack.c.h.b16 %v2126
    %v2548 = vunpack.c.l.b16 %v2127
    %v2549 = vunpack.c.h.b16 %v2127
    %v2550 = vunpack.c.l.b16 %v2128
    %v2551 = vunpack.c.h.b16 %v2128
    %v2552 = vunpack.c.l.b16 %v2129
    %v2553 = vunpack.c.h.b16 %v2129
    %v2554 = vunpack.c.l.b16 %v2130
    %v2555 = vunpack.c.h.b16 %v2130
    %v2556 = vunpack.c.l.b16 %v2131
    %v2557 = vunpack.c.h.b16 %v2131
    %v2558 = vpack.c.b16 %v2310, %v2302
    %v2559 = vpack.c.b16 %v2311, %v2303
    %v2560 = vpack.c.b16 %v2312, %v2304
    %v2561 = vpack.c.b16 %v2313, %v2305
    %v2562 = vpack.c.b16 %v2314, %v2306
    %v2563 = vpack.c.b16 %v2315, %v2307
    %v2564 = vpack.c.b16 %v2316, %v2308
    %v2565 = vpack.c.b16 %v2317, %v2309
    %v2566 = vpack.c.b16 %v2326, %v2318
    %v2567 = vpack.c.b16 %v2327, %v2319
    %v2568 = vpack.c.b16 %v2328, %v2320
    %v2569 = vpack.c.b16 %v2329, %v2321
    %v2570 = vpack.c.b16 %v2330, %v2322
    %v2571 = vpack.c.b16 %v2331, %v2323
    %v2572 = vpack.c.b16 %v2332, %v2324
    %v2573 = vpack.c.b16 %v2333, %v2325
    %v2574 = vpack.c.b16 %v2342, %v2334
    %v2575 = vpack.c.b16 %v2343, %v2335
    %v2576 = vpack.c.b16 %v2344, %v2336
    %v2577 = vpack.c.b16 %v2345, %v2337
    %v2578 = vpack.c.b16 %v2346, %v2338
    %v2579 = vpack.c.b16 %v2347, %v2339
    %v2580 = vpack.c.b16 %v2348, %v2340
    %v2581 = vpack.c.b16 %v2349, %v2341
    %v2582 = vpack.c.b16 %v2358, %v2350
    %v2583 = vpack.c.b16 %v2359, %v2351
    %v2584 = vpack.c.b16 %v2360, %v2352
    %v2585 = vpack.c.b16 %v2361, %v2353
    %v2586 = vpack.c.b16 %v2362, %v2354
    %v2587 = vpack.c.b16 %v2363, %v2355
    %v2588 = vpack.c.b16 %v2364, %v2356
    %v2589 = vpack.c.b16 %v2365, %v2357
    %v2590 = vpack.c.b16 %v2374, %v2366
    %v2591 = vpack.c.b16 %v2375, %v2367
    %v2592 = vpack.c.b16 %v2376, %v2368
    %v2593 = vpack.c.b16 %v2377, %v2369
    %v2594 = vpack.c.b16 %v2378, %v2370
    %v2595 = vpack.c.b16 %v2379, %v2371
    %v2596 = vpack.c.b16 %v2380, %v2372
    %v2597 = vpack.c.b16 %v2381, %v2373
    %v2598 = vpack.c.b16 %v2390, %v2382
    %v2599 = vpack.c.b16 %v2391, %v2383
    %v2600 = vpack.c.b16 %v2392, %v2384
    %v2601 = vpack.c.b16 %v2393, %v2385
    %v2602 = vpack.c.b16 %v2394, %v2386
    %v2603 = vpack.c.b16 %v2395, %v2387
    %v2604 = vpack.c.b16 %v2396, %v2388
    %v2605 = vpack.c.b16 %v2397, %v2389
    %v2606 = vpack.c.b16 %v2406, %v2398
    %v2607 = vpack.c.b16 %v2407, %v2399
    %v2608 = vpack.c.b16 %v2408, %v2400
    %v2609 = vpack.c.b16 %v2409, %v2401
    %v2610 = vpack.c.b16 %v2410, %v2402
    %v2611 = vpack.c.b16 %v2411, %v2403
    %v2612 = vpack.c.b16 %v2412, %v2404
    %v2613 = vpack.c.b16 %v2413, %v2405
    %v2614 = vpack.c.b16 %v2422, %v2414
    %v2615 = vpack.c.b16 %v2423, %v2415
    %v2616 = vpack.c.b16 %v2424, %v2416
    %v2617 = vpack.c.b16 %v2425, %v2417
    %v2618 = vpack.c.b16 %v2426, %v2418
    %v2619 = vpack.c.b16 %v2427, %v2419
    %v2620 = vpack.c.b16 %v2428, %v2420
    %v2621 = vpack.c.b16 %v2429, %v2421
    %v2622 = vpack.c.b16 %v2438, %v2430
    %v2623 = vpack.c.b16 %v2439, %v2431
    %v2624 = vpack.c.b16 %v2440, %v2432
    %v2625 = vpack.c.b16 %v2441, %v2433
    %v2626 = vpack.c.b16 %v2442, %v2434
    %v2627 = vpack.c.b16 %v2443, %v2435
    %v2628 = vpack.c.b16 %v2444, %v2436
    %v2629 = vpack.c.b16 %v2445, %v2437
    %v2630 = vpack.c.b16 %v2454, %v2446
    %v2631 = vpack.c.b16 %v2455, %v2447
    %v2632 = vpack.c.b16 %v2456, %v2448
    %v2633 = vpack.c.b16 %v2457, %v2449
    %v2634 = vpack.c.b16 %v2458, %v2450
    %v2635 = vpack.c.b16 %v2459, %v2451
    %v2636 = vpack.c.b16 %v2460, %v2452
    %v2637 = vpack.c.b16 %v2461, %v2453
    %v2638 = vpack.c.b16 %v2470, %v2462
    %v2639 = vpack.c.b16 %v2471, %v2463
    %v2640 = vpack.c.b16 %v2472, %v2464
    %v2641 = vpack.c.b16 %v2473, %v2465
    %v2642 = vpack.c.b16 %v2474, %v2466
    %v2643 = vpack.c.b16 %v2475, %v2467
    %v2644 = vpack.c.b16 %v2476, %v2468
    %v2645 = vpack.c.b16 %v2477, %v2469
    %v2646 = vpack.c.b16 %v2486, %v2478
    %v2647 = vpack.c.b16 %v2487, %v2479
    %v2648 = vpack.c.b16 %v2488, %v2480
    %v2649 = vpack.c.b16 %v2489, %v2481
    %v2650 = vpack.c.b16 %v2490, %v2482
    %v2651 = vpack.c.b16 %v2491, %v2483
    %v2652 = vpack.c.b16 %v2492, %v2484
    %v2653 = vpack.c.b16 %v2493, %v2485
    %v2654 = vpack.c.b16 %v2502, %v2494
    %v2655 = vpack.c.b16 %v2503, %v2495
    %v2656 = vpack.c.b16 %v2504, %v2496
    %v2657 = vpack.c.b16 %v2505, %v2497
    %v2658 = vpack.c.b16 %v2506, %v2498
    %v2659 = vpack.c.b16 %v2507, %v2499
    %v2660 = vpack.c.b16 %v2508, %v2500
    %v2661 = vpack.c.b16 %v2509, %v2501
    %v2662 = vpack.c.b16 %v2518, %v2510
    %v2663 = vpack.c.b16 %v2519, %v2511
    %v2664 = vpack.c.b16 %v2520, %v2512
    %v2665 = vpack.c.b16 %v2521, %v2513
    %v2666 = vpack.c.b16 %v2522, %v2514
    %v2667 = vpack.c.b16 %v2523, %v2515
    %v2668 = vpack.c.b16 %v2524, %v2516
    %v2669 = vpack.c.b16 %v2525, %v2517
    %v2670 = vpack.c.b16 %v2534, %v2526
    %v2671 = vpack.c.b16 %v2535, %v2527
    %v2672 = vpack.c.b16 %v2536, %v2528
    %v2673 = vpack.c.b16 %v2537, %v2529
    %v2674 = vpack.c.b16 %v2538, %v2530
    %v2675 = vpack.c.b16 %v2539, %v2531
    %v2676 = vpack.c.b16 %v2540, %v2532
    %v2677 = vpack.c.b16 %v2541, %v2533
    %v2678 = vpack.c.b16 %v2550, %v2542
    %v2679 = vpack.c.b16 %v2551, %v2543
    %v2680 = vpack.c.b16 %v2552, %v2544
    %v2681 = vpack.c.b16 %v2553, %v2545
    %v2682 = vpack.c.b16 %v2554, %v2546
    %v2683 = vpack.c.b16 %v2555, %v2547
    %v2684 = vpack.c.b16 %v2556, %v2548
    %v2685 = vpack.c.b16 %v2557, %v2549
    %2814 = vmatprep.subr.bf16.mxu0 %v2559
    %2815 = vmatpush1.bf16.msra.mxu0 %v2558
    %2816 = vmatprep.subr.bf16.mxu0 %v2567
    %2817 = vmatpush1.bf16.msra.mxu0 %v2566
    %2818 = vmatprep.subr.bf16.mxu0 %v2575
    %2819 = vmatpush1.bf16.msra.mxu0 %v2574
    %2820 = vmatprep.subr.bf16.mxu0 %v2583
    %2821 = vmatpush1.bf16.msra.mxu0 %v2582
    %2822 = vmatprep.subr.bf16.mxu0 %v2591
    %2823 = vmatpush1.bf16.msra.mxu0 %v2590
    %2824 = vmatprep.subr.bf16.mxu0 %v2599
    %2825 = vmatpush1.bf16.msra.mxu0 %v2598
    %2826 = vmatprep.subr.bf16.mxu0 %v2607
    %2827 = vmatpush1.bf16.msra.mxu0 %v2606
    %2828 = vmatprep.subr.bf16.mxu0 %v2615
    %2829 = vmatpush1.bf16.msra.mxu0 %v2614
    %2830 = vmatprep.subr.bf16.mxu0 %v2623
    %2831 = vmatpush1.bf16.msra.mxu0 %v2622
    %2832 = vmatprep.subr.bf16.mxu0 %v2631
    %2833 = vmatpush1.bf16.msra.mxu0 %v2630
    %2834 = vmatprep.subr.bf16.mxu0 %v2639
    %2835 = vmatpush1.bf16.msra.mxu0 %v2638
    %2836 = vmatprep.subr.bf16.mxu0 %v2647
    %2837 = vmatpush1.bf16.msra.mxu0 %v2646
    %2838 = vmatprep.subr.bf16.mxu0 %v2655
    %2839 = vmatpush1.bf16.msra.mxu0 %v2654
    %2840 = vmatprep.subr.bf16.mxu0 %v2663
    %2841 = vmatpush1.bf16.msra.mxu0 %v2662
    %2842 = vmatprep.subr.bf16.mxu0 %v2671
    %2843 = vmatpush1.bf16.msra.mxu0 %v2670
    %2844 = vmatprep.subr.bf16.mxu0 %v2679
    %2845 = vmatpush1.bf16.msra.mxu0 %v2678
    %2846 = vmatprep.mubr.bf16.mxu0 %v2003
    %2847 = vmatmul.mubr.bf16.gmra.mrb[0].mxu0 %v2002
    %v2848 = vpop.f32.mrb[0].mxu0
    %v2849 = vadd.f32 %v2137, %v2848
    %v2850 = vpop.f32.mrb[0].mxu0
    %v2851 = vadd.f32 %v2141, %v2850
    %v2852 = vpop.f32.mrb[0].mxu0
    %v2853 = vpop.f32.mrb[0].mxu0
    %2854 = vdwg.mxu0
    %2855 = vmatprep.subr.bf16.mxu0 %v2561
    %2856 = vmatpush1.bf16.msra.mxu0 %v2560
    %2857 = vmatprep.subr.bf16.mxu0 %v2569
    %2858 = vmatpush1.bf16.msra.mxu0 %v2568
    %2859 = vmatprep.subr.bf16.mxu0 %v2577
    %2860 = vmatpush1.bf16.msra.mxu0 %v2576
    %2861 = vmatprep.subr.bf16.mxu0 %v2585
    %2862 = vmatpush1.bf16.msra.mxu0 %v2584
    %2863 = vmatprep.subr.bf16.mxu0 %v2593
    %2864 = vmatpush1.bf16.msra.mxu0 %v2592
    %2865 = vmatprep.subr.bf16.mxu0 %v2601
    %2866 = vmatpush1.bf16.msra.mxu0 %v2600
    %2867 = vmatprep.subr.bf16.mxu0 %v2609
    %2868 = vmatpush1.bf16.msra.mxu0 %v2608
    %2869 = vmatprep.subr.bf16.mxu0 %v2617
    %2870 = vmatpush1.bf16.msra.mxu0 %v2616
    %2871 = vmatprep.subr.bf16.mxu0 %v2625
    %2872 = vmatpush1.bf16.msra.mxu0 %v2624
    %2873 = vmatprep.subr.bf16.mxu0 %v2633
    %2874 = vmatpush1.bf16.msra.mxu0 %v2632
    %2875 = vmatprep.subr.bf16.mxu0 %v2641
    %2876 = vmatpush1.bf16.msra.mxu0 %v2640
    %2877 = vmatprep.subr.bf16.mxu0 %v2649
    %2878 = vmatpush1.bf16.msra.mxu0 %v2648
    %2879 = vmatprep.subr.bf16.mxu0 %v2657
    %2880 = vmatpush1.bf16.msra.mxu0 %v2656
    %2881 = vmatprep.subr.bf16.mxu0 %v2665
    %2882 = vmatpush1.bf16.msra.mxu0 %v2664
    %2883 = vmatprep.subr.bf16.mxu0 %v2673
    %2884 = vmatpush1.bf16.msra.mxu0 %v2672
    %2885 = vmatprep.subr.bf16.mxu0 %v2681
    %2886 = vmatpush1.bf16.msra.mxu0 %v2680
    %2887 = vmatprep.mubr.bf16.mxu0 %v2003
    %2888 = vmatmul.mubr.bf16.gmra.mrb[0].mxu0 %v2002
    %v2889 = vpop.f32.mrb[0].mxu0
    %v2890 = vadd.f32 %v2145, %v2889
    %v2891 = vpop.f32.mrb[0].mxu0
    %v2892 = vadd.f32 %v2149, %v2891
    %v2893 = vpop.f32.mrb[0].mxu0
    %v2894 = vpop.f32.mrb[0].mxu0
    %2895 = vdwg.mxu0
    %2896 = vmatprep.subr.bf16.mxu0 %v2563
    %2897 = vmatpush1.bf16.msra.mxu0 %v2562
    %2898 = vmatprep.subr.bf16.mxu0 %v2571
    %2899 = vmatpush1.bf16.msra.mxu0 %v2570
    %2900 = vmatprep.subr.bf16.mxu0 %v2579
    %2901 = vmatpush1.bf16.msra.mxu0 %v2578
    %2902 = vmatprep.subr.bf16.mxu0 %v2587
    %2903 = vmatpush1.bf16.msra.mxu0 %v2586
    %2904 = vmatprep.subr.bf16.mxu0 %v2595
    %2905 = vmatpush1.bf16.msra.mxu0 %v2594
    %2906 = vmatprep.subr.bf16.mxu0 %v2603
    %2907 = vmatpush1.bf16.msra.mxu0 %v2602
    %2908 = vmatprep.subr.bf16.mxu0 %v2611
    %2909 = vmatpush1.bf16.msra.mxu0 %v2610
    %2910 = vmatprep.subr.bf16.mxu0 %v2619
    %2911 = vmatpush1.bf16.msra.mxu0 %v2618
    %2912 = vmatprep.subr.bf16.mxu0 %v2627
    %2913 = vmatpush1.bf16.msra.mxu0 %v2626
    %2914 = vmatprep.subr.bf16.mxu0 %v2635
    %2915 = vmatpush1.bf16.msra.mxu0 %v2634
    %2916 = vmatprep.subr.bf16.mxu0 %v2643
    %2917 = vmatpush1.bf16.msra.mxu0 %v2642
    %2918 = vmatprep.subr.bf16.mxu0 %v2651
    %2919 = vmatpush1.bf16.msra.mxu0 %v2650
    %2920 = vmatprep.subr.bf16.mxu0 %v2659
    %2921 = vmatpush1.bf16.msra.mxu0 %v2658
    %2922 = vmatprep.subr.bf16.mxu0 %v2667
    %2923 = vmatpush1.bf16.msra.mxu0 %v2666
    %2924 = vmatprep.subr.bf16.mxu0 %v2675
    %2925 = vmatpush1.bf16.msra.mxu0 %v2674
    %2926 = vmatprep.subr.bf16.mxu0 %v2683
    %2927 = vmatpush1.bf16.msra.mxu0 %v2682
    %2928 = vmatprep.mubr.bf16.mxu0 %v2003
    %2929 = vmatmul.mubr.bf16.gmra.mrb[0].mxu0 %v2002
    %v2930 = vpop.f32.mrb[0].mxu0
    %v2931 = vadd.f32 %v2153, %v2930
    %v2932 = vpop.f32.mrb[0].mxu0
    %v2933 = vadd.f32 %v2157, %v2932
    %v2934 = vpop.f32.mrb[0].mxu0
    %v2935 = vpop.f32.mrb[0].mxu0
    %2936 = vdwg.mxu0
    %2937 = vmatprep.subr.bf16.mxu0 %v2565
    %2938 = vmatpush1.bf16.msra.mxu0 %v2564
    %2939 = vmatprep.subr.bf16.mxu0 %v2573
    %2940 = vmatpush1.bf16.msra.mxu0 %v2572
    %2941 = vmatprep.subr.bf16.mxu0 %v2581
    %2942 = vmatpush1.bf16.msra.mxu0 %v2580
    %2943 = vmatprep.subr.bf16.mxu0 %v2589
    %2944 = vmatpush1.bf16.msra.mxu0 %v2588
    %2945 = vmatprep.subr.bf16.mxu0 %v2597
    %2946 = vmatpush1.bf16.msra.mxu0 %v2596
    %2947 = vmatprep.subr.bf16.mxu0 %v2605
    %2948 = vmatpush1.bf16.msra.mxu0 %v2604
    %2949 = vmatprep.subr.bf16.mxu0 %v2613
    %2950 = vmatpush1.bf16.msra.mxu0 %v2612
    %2951 = vmatprep.subr.bf16.mxu0 %v2621
    %2952 = vmatpush1.bf16.msra.mxu0 %v2620
    %2953 = vmatprep.subr.bf16.mxu0 %v2629
    %2954 = vmatpush1.bf16.msra.mxu0 %v2628
    %2955 = vmatprep.subr.bf16.mxu0 %v2637
    %2956 = vmatpush1.bf16.msra.mxu0 %v2636
    %2957 = vmatprep.subr.bf16.mxu0 %v2645
    %2958 = vmatpush1.bf16.msra.mxu0 %v2644
    %2959 = vmatprep.subr.bf16.mxu0 %v2653
    %2960 = vmatpush1.bf16.msra.mxu0 %v2652
    %2961 = vmatprep.subr.bf16.mxu0 %v2661
    %2962 = vmatpush1.bf16.msra.mxu0 %v2660
    %2963 = vmatprep.subr.bf16.mxu0 %v2669
    %2964 = vmatpush1.bf16.msra.mxu0 %v2668
    %2965 = vmatprep.subr.bf16.mxu0 %v2677
    %2966 = vmatpush1.bf16.msra.mxu0 %v2676
    %2967 = vmatprep.subr.bf16.mxu0 %v2685
    %2968 = vmatpush1.bf16.msra.mxu0 %v2684
    %2969 = vmatprep.mubr.bf16.mxu0 %v2003
    %2970 = vmatmul.mubr.bf16.gmra.mrb[0].mxu0 %v2002
    %v2971 = vpop.f32.mrb[0].mxu0
    %v2972 = vadd.f32 %v2161, %v2971
    %v2973 = vpop.f32.mrb[0].mxu0
    %v2974 = vadd.f32 %v2165, %v2973
    %v2975 = vpop.f32.mrb[0].mxu0
    %v2976 = vpop.f32.mrb[0].mxu0
    %2977 = vdwg.mxu0
    %v2978 = vxor.u32 %v2849, 2147483648
    %v2979 = vxor.u32 %v2851, 2147483648
    %v2980 = vxor.u32 %v2890, 2147483648
    %v2981 = vxor.u32 %v2892, 2147483648
    %v2982 = vxor.u32 %v2931, 2147483648
    %v2983 = vxor.u32 %v2933, 2147483648
    %v2984 = vxor.u32 %v2972, 2147483648
    %v2985 = vxor.u32 %v2974, 2147483648
    %v2986 = vmul.f32 %v2978, 1.442695
    %v2987 = vpow.pop %v2986
    %v2988 = vmul.f32 %v2979, 1.442695
    %v2989 = vpow.pop %v2988
    %v2990 = vmul.f32 %v2980, 1.442695
    %v2991 = vpow.pop %v2990
    %v2992 = vmul.f32 %v2981, 1.442695
    %v2993 = vpow.pop %v2992
    %v2994 = vmul.f32 %v2982, 1.442695
    %v2995 = vpow.pop %v2994
    %v2996 = vmul.f32 %v2983, 1.442695
    %v2997 = vpow.pop %v2996
    %v2998 = vmul.f32 %v2984, 1.442695
    %v2999 = vpow.pop %v2998
    %v3000 = vmul.f32 %v2985, 1.442695
    %v3001 = vpow.pop %v3000
    %v3002 = vadd.f32 %v2987, 1.0
    %v3003 = vadd.f32 %v2989, 1.0
    %v3004 = vadd.f32 %v2991, 1.0
    %v3005 = vadd.f32 %v2993, 1.0
    %v3006 = vadd.f32 %v2995, 1.0
    %v3007 = vadd.f32 %v2997, 1.0
    %v3008 = vadd.f32 %v2999, 1.0
    %v3009 = vadd.f32 %v3001, 1.0
    %v3010 = vrcp.pop %v3002
    %v3011 = vmul.f32 1.0, %v3010
    %v3012 = vrcp.pop %v3003
    %v3013 = vmul.f32 1.0, %v3012
    %v3014 = vrcp.pop %v3004
    %v3015 = vmul.f32 1.0, %v3014
    %v3016 = vrcp.pop %v3005
    %v3017 = vmul.f32 1.0, %v3016
    %v3018 = vrcp.pop %v3006
    %v3019 = vmul.f32 1.0, %v3018
    %v3020 = vrcp.pop %v3007
    %v3021 = vmul.f32 1.0, %v3020
    %v3022 = vrcp.pop %v3008
    %v3023 = vmul.f32 1.0, %v3022
    %v3024 = vrcp.pop %v3009
    %v3025 = vmul.f32 1.0, %v3024
    %3026 = vst [vmem:[#allocation8] sm:$0xff] %v3011
    %3027 = vst [vmem:[#allocation8 + $0x8] sm:$0xff] %v3013
    %3028 = vst [vmem:[#allocation8 + $0x10] sm:$0xff] %v3015
    %3029 = vst [vmem:[#allocation8 + $0x18] sm:$0xff] %v3017
    %3030 = vst [vmem:[#allocation8 + $0x20] sm:$0xff] %v3019
    %3031 = vst [vmem:[#allocation8 + $0x28] sm:$0xff] %v3021
    %3032 = vst [vmem:[#allocation8 + $0x30] sm:$0xff] %v3023
    %3033 = vst [vmem:[#allocation8 + $0x38] sm:$0xff] %v3025
    // Predicated region
    $region34: #{tpu_custom_call.1} parent=1 // pred_check
      _
    $region35: #{tpu_custom_call.1} parent=1 // pred_check_branch
      %3035 = sbr.rel (0) target = $region37
    $region36: #{tpu_custom_call.1} parent=1 // pred_region
      %s3037 = ssub.s32 1024, 1024
      %3038 = vsyncadd [#allocation4], %s3037
      %s3040 = sshll.u32 [#allocation8], 4
      %s3041 = int_to_ptr.vmem [resolvable:$true] %s3040
      %3043 = dma.vmem_to_hbm [thread:$0]  %s3041, 1024, %s5, [#allocation4]
    $region37: #{tpu_custom_call.1} parent=1 // pred_fallthru
      _
    // Predicated region
    $region38: #{tpu_custom_call.1} parent=1 // pred_check
      _
    $region39: #{tpu_custom_call.1} parent=1 // pred_check_branch
      %3045 = sbr.rel (0) target = $region41
    $region40: #{tpu_custom_call.1} parent=1 // pred_region
      %3046 = dma.done [#allocation4], 1024
    $region41: #{tpu_custom_call.1} parent=1 // pred_fallthru
      _
    %3047 = vsyncpa [#allocation3], 1
    %3048 = vsyncpa [#allocation6], 1
    %3049 = vsyncpa [#allocation4], 1

</llo_original>
